<compile_context>
chip_gen: v6e
topology: v6e:2x2x1
jax: 0.10.0
libtpu: 0.0.40
codegen_flags: <defaults>
</compile_context>

<pallas_src>
import functools
import math

import jax
import jax.numpy as jnp
from jax.experimental import pallas as pl
from jax.experimental.pallas import tpu as pltpu


_VMEM_LIMIT = 64 * 1024 * 1024  # fits v5e/v6e/v7x physical VMEM


def _row_tile(m):
    """Pick an M tile: whole slab if small, 128-row tiles otherwise."""
    if m <= 256:
        return m
    assert m % 128 == 0, "rows must be a multiple of 128 for tiling"
    return 128


# --------------------- Kernel 1: RMSNorm + fused QKV ------------------------

def _norm_matmul_kernel(x_ref, g_ref, w_ref, o_ref, *, eps):
    x = x_ref[...].astype(jnp.float32)                       # (tm, D)
    ms = jnp.mean(x * x, axis=-1, keepdims=True)
    xn = x * jax.lax.rsqrt(ms + eps) * g_ref[...].astype(jnp.float32)
    o_ref[...] = jnp.dot(xn, w_ref[...],
                         preferred_element_type=jnp.float32).astype(o_ref.dtype)


def norm_matmul(x2d, gamma, w_t, eps):
    """RMSNorm(x) @ w_t. x2d: [M, D], w_t: [D, N] (pre-transposed)."""
    M, D = x2d.shape
    N = w_t.shape[1]
    tm = _row_tile(M)
    # TODO(synk): at real model sizes also tile K/N with a VMEM f32 accumulator;
    # at these dims the weights are VMEM-resident per block.
    return pl.pallas_call(
        functools.partial(_norm_matmul_kernel, eps=eps),
        out_shape=jax.ShapeDtypeStruct((M, N), x2d.dtype),
        grid=(M // tm,),
        in_specs=[pl.BlockSpec((tm, D), lambda i: (i, 0)),
                  pl.BlockSpec((1, D), lambda i: (0, 0)),
                  pl.BlockSpec((D, N), lambda i: (0, 0))],
        out_specs=pl.BlockSpec((tm, N), lambda i: (i, 0)),
        compiler_params=pltpu.CompilerParams(
            dimension_semantics=("parallel",),
            vmem_limit_bytes=_VMEM_LIMIT),
    )(x2d, gamma.reshape(1, D), w_t)


# --------------------- Kernel 2: attention (per-batch) ----------------------

def _attention_kernel(q_ref, k_ref, v_ref, o_ref, *, scale, n_rep, start_pos):
    # q_ref: (1, S, H, hd), k_ref/v_ref: (1, T, Hk, hd), o_ref: (1, S, H*hd)
    S, H, hd = q_ref.shape[1], q_ref.shape[2], q_ref.shape[3]
    T = k_ref.shape[1]

    q_all = q_ref[0].astype(jnp.float32)        # (S, H, hd)
    k_all = k_ref[0].astype(jnp.float32)        # (T, Hk, hd)
    v_all = v_ref[0].astype(jnp.float32)        # (T, Hk, hd)

    # causal mask built in-kernel (no HBM mask traffic)
    row = jax.lax.broadcasted_iota(jnp.int32, (S, T), 0)
    col = jax.lax.broadcasted_iota(jnp.int32, (S, T), 1)
    allowed = col <= (row + start_pos)

    outs = []
    for h in range(H):                          # static unroll over heads
        kvh = h // n_rep                        # GQA: no repeat_kv materialization
        q = q_all[:, h, :]                      # (S, hd)
        k = k_all[:, kvh, :]                    # (T, hd)
        v = v_all[:, kvh, :]                    # (T, hd)
        s = jnp.dot(q, k.T, preferred_element_type=jnp.float32) * scale
        s = jnp.where(allowed, s, -1e30)        # finite mask: no -inf NaN hazard
        m = jnp.max(s, axis=-1, keepdims=True)
        p = jnp.exp(s - m)
        p = p / jnp.sum(p, axis=-1, keepdims=True)
        outs.append(jnp.dot(p, v, preferred_element_type=jnp.float32))

    # single lane-dense store of the full (S, D) slab
    o_ref[0] = jnp.concatenate(outs, axis=-1).astype(o_ref.dtype)


def attention_core(xq, xk, xv, start_pos):
    """xq: [B, S, H, hd], xk/xv: [B, T, Hk, hd] -> [B, S, H*hd] (lane-dense)."""
    B, S, H, hd = xq.shape
    T, Hk = xk.shape[1], xk.shape[2]
    n_rep = H // Hk
    D = H * hd
    scale = 1.0 / math.sqrt(hd)
    return pl.pallas_call(
        functools.partial(_attention_kernel, scale=scale, n_rep=n_rep,
                          start_pos=start_pos),
        out_shape=jax.ShapeDtypeStruct((B, S, D), xq.dtype),
        grid=(B,),
        in_specs=[
            pl.BlockSpec((1, S, H, hd), lambda b: (b, 0, 0, 0)),
            pl.BlockSpec((1, T, Hk, hd), lambda b: (b, 0, 0, 0)),
            pl.BlockSpec((1, T, Hk, hd), lambda b: (b, 0, 0, 0)),
        ],
        out_specs=pl.BlockSpec((1, S, D), lambda b: (b, 0, 0)),
        compiler_params=pltpu.CompilerParams(
            dimension_semantics=("parallel",),
            vmem_limit_bytes=_VMEM_LIMIT),
    )(xq, xk, xv)


# --------------------- Kernel 3: wo projection + residual -------------------

def _proj_add_kernel(a_ref, w_ref, r_ref, o_ref):
    acc = jnp.dot(a_ref[...].astype(jnp.float32), w_ref[...],
                  preferred_element_type=jnp.float32)
    o_ref[...] = (acc + r_ref[...].astype(jnp.float32)).astype(o_ref.dtype)


def proj_residual(a2d, w_t, resid2d):
    """resid + a @ w_t. a2d: [M, K], w_t: [K, N], resid2d: [M, N]."""
    M, K = a2d.shape
    N = w_t.shape[1]
    tm = _row_tile(M)
    return pl.pallas_call(
        _proj_add_kernel,
        out_shape=jax.ShapeDtypeStruct((M, N), resid2d.dtype),
        grid=(M // tm,),
        in_specs=[pl.BlockSpec((tm, K), lambda i: (i, 0)),
                  pl.BlockSpec((K, N), lambda i: (0, 0)),
                  pl.BlockSpec((tm, N), lambda i: (i, 0))],
        out_specs=pl.BlockSpec((tm, N), lambda i: (i, 0)),
        compiler_params=pltpu.CompilerParams(
            dimension_semantics=("parallel",),
            vmem_limit_bytes=_VMEM_LIMIT),
    )(a2d, w_t, resid2d)


# --------------------- Kernel 4: RMSNorm + SwiGLU FFN + residual ------------

def _norm_ffn_add_kernel(h_ref, g_ref, w1_ref, w3_ref, w2_ref, o_ref, *, eps):
    h = h_ref[...].astype(jnp.float32)                        # (tm, D)
    ms = jnp.mean(h * h, axis=-1, keepdims=True)
    xn = h * jax.lax.rsqrt(ms + eps) * g_ref[...].astype(jnp.float32)
    h1 = jnp.dot(xn, w1_ref[...], preferred_element_type=jnp.float32)
    h3 = jnp.dot(xn, w3_ref[...], preferred_element_type=jnp.float32)
    act = (h1 * jax.nn.sigmoid(h1)) * h3                      # F.silu(h1) * h3
    o_ref[...] = (h + jnp.dot(act, w2_ref[...],
                              preferred_element_type=jnp.float32)
                  ).astype(o_ref.dtype)


def norm_ffn_residual(h2d, gamma, w1_t, w3_t, w2_t, eps):
    """h + w2(silu(w1(RMSNorm(h))) * w3(RMSNorm(h)))."""
    M, D = h2d.shape
    Hf = w1_t.shape[1]
    tm = _row_tile(M)
    # TODO(synk): at real model sizes stream over Hf tiles with a [tm, D]
    # accumulator instead of materializing full [tm, Hf] intermediates.
    return pl.pallas_call(
        functools.partial(_norm_ffn_add_kernel, eps=eps),
        out_shape=jax.ShapeDtypeStruct((M, D), h2d.dtype),
        grid=(M // tm,),
        in_specs=[pl.BlockSpec((tm, D), lambda i: (i, 0)),
                  pl.BlockSpec((1, D), lambda i: (0, 0)),
                  pl.BlockSpec((D, Hf), lambda i: (0, 0)),
                  pl.BlockSpec((D, Hf), lambda i: (0, 0)),
                  pl.BlockSpec((Hf, D), lambda i: (0, 0))],
        out_specs=pl.BlockSpec((tm, D), lambda i: (i, 0)),
        compiler_params=pltpu.CompilerParams(
            dimension_semantics=("parallel",),
            vmem_limit_bytes=_VMEM_LIMIT),
    )(h2d, gamma.reshape(1, D), w1_t, w3_t, w2_t)


# ------------------------------ JAX glue ------------------------------------

def apply_rotary_emb(xq, xk, cos, sin):
    """xq: [B,S,H,hd], xk: [B,S,Hk,hd], cos/sin: [S, hd//2]."""
    def rot(x):
        B, S, H, hd = x.shape
        xr = x.astype(jnp.float32).reshape(B, S, H, hd // 2, 2)
        re, im = xr[..., 0], xr[..., 1]
        c = cos.reshape(1, S, 1, hd // 2)
        s = sin.reshape(1, S, 1, hd // 2)
        out = jnp.stack([re * c - im * s, re * s + im * c], axis=-1)
        return out.reshape(B, S, H, hd).astype(x.dtype)
    return rot(xq), rot(xk)


def transformer_block_forward(params, x, start_pos, cos, sin,
                              n_heads, n_kv_heads, norm_eps):
    B, S, D = x.shape
    head_dim = D // n_heads
    Dq = n_heads * head_dim
    Dkv = n_kv_heads * head_dim
    M = B * S
    x2d = x.reshape(M, D)

    # --- attention branch: fused RMSNorm + QKV projection (one kernel) ---
    qkv = norm_matmul(x2d, params["attn_norm_w"], params["wqkv_t"], norm_eps)
    xq = qkv[:, :Dq].reshape(B, S, n_heads, head_dim)
    xk = qkv[:, Dq:Dq + Dkv].reshape(B, S, n_kv_heads, head_dim)
    xv = qkv[:, Dq + Dkv:].reshape(B, S, n_kv_heads, head_dim)

    xq, xk = apply_rotary_emb(xq, xk, cos, sin)

    # TODO(synk): start_pos > 0 KV-cache append/read not implemented
    # (prefill-only); keys/values == current xk/xv.
    attn = attention_core(xq, xk, xv, start_pos)          # [B, S, D] lane-dense

    # wo projection with residual add fused into the epilogue
    h2d = proj_residual(attn.reshape(M, Dq), params["wo_t"], x2d)

    # --- feed-forward branch: fused RMSNorm + SwiGLU + residual ---
    out2d = norm_ffn_residual(h2d, params["ffn_norm_w"], params["w1_t"],
                              params["w3_t"], params["w2_t"], norm_eps)
    return out2d.reshape(B, S, D)


# ------------------------ pure-JAX reference (check) -------------------------

def _reference_forward(raw, x, start_pos, cos, sin, n_heads, n_kv_heads, eps):
    B, S, D = x.shape
    hd = D // n_heads
    n_rep = n_heads // n_kv_heads

    def rmsnorm(v, w):
        ms = jnp.mean(v * v, axis=-1, keepdims=True)
        return v * jax.lax.rsqrt(ms + eps) * w

    hN = rmsnorm(x, raw["attn_norm_w"])
    xq = jnp.einsum("bsd,nd->bsn", hN, raw["wq"]).reshape(B, S, n_heads, hd)
    xk = jnp.einsum("bsd,nd->bsn", hN, raw["wk"]).reshape(B, S, n_kv_heads, hd)
    xv = jnp.einsum("bsd,nd->bsn", hN, raw["wv"]).reshape(B, S, n_kv_heads, hd)
    xq, xk = apply_rotary_emb(xq, xk, cos, sin)
    keys = jnp.repeat(xk, n_rep, axis=2)
    vals = jnp.repeat(xv, n_rep, axis=2)
    q = jnp.transpose(xq, (0, 2, 1, 3))
    k = jnp.transpose(keys, (0, 2, 1, 3))
    v = jnp.transpose(vals, (0, 2, 1, 3))
    scores = jnp.einsum("bhqd,bhkd->bhqk", q, k) / math.sqrt(hd)
    mask = jnp.full((S, start_pos + S), -jnp.inf, jnp.float32)
    mask = jnp.triu(mask, k=start_pos + 1)
    scores = scores + mask
    p = jax.nn.softmax(scores.astype(jnp.float32), axis=-1)
    out = jnp.einsum("bhqk,bhkd->bhqd", p, v)
    out = jnp.transpose(out, (0, 2, 1, 3)).reshape(B, S, D)
    h = x + jnp.einsum("bsn,dn->bsd", out, raw["wo"])
    hN2 = rmsnorm(h, raw["ffn_norm_w"])
    h1 = jnp.einsum("bsd,fd->bsf", hN2, raw["w1"])
    h3 = jnp.einsum("bsd,fd->bsf", hN2, raw["w3"])
    ffn = jnp.einsum("bsf,df->bsd", (h1 * jax.nn.sigmoid(h1)) * h3, raw["w2"])
    return h + ffn


# ------------------------------ main -----------------------------------------

if __name__ == "__main__":
    # Small LLaMA-style config
    dim = 128
    n_heads = 4
    n_kv_heads = 2
    head_dim = dim // n_heads
    multiple_of = 256
    norm_eps = 1e-5
    B, S = 2, 8
    start_pos = 0

    # FeedForward hidden dim (same formula as FeedForward.__init__)
    hidden_dim = 4 * dim
    hidden_dim = int(2 * hidden_dim / 3)
    hidden_dim = multiple_of * ((hidden_dim + multiple_of - 1) // multiple_of)

    key = jax.random.PRNGKey(0)
    ks = jax.random.split(key, 9)
    scale = 0.02
    raw = {
        "wq": scale * jax.random.normal(ks[0], (n_heads * head_dim, dim), jnp.float32),
        "wk": scale * jax.random.normal(ks[1], (n_kv_heads * head_dim, dim), jnp.float32),
        "wv": scale * jax.random.normal(ks[2], (n_kv_heads * head_dim, dim), jnp.float32),
        "wo": scale * jax.random.normal(ks[3], (dim, n_heads * head_dim), jnp.float32),
        "w1": scale * jax.random.normal(ks[4], (hidden_dim, dim), jnp.float32),
        "w2": scale * jax.random.normal(ks[5], (dim, hidden_dim), jnp.float32),
        "w3": scale * jax.random.normal(ks[6], (hidden_dim, dim), jnp.float32),
        "attn_norm_w": jnp.ones((dim,), jnp.float32),
        "ffn_norm_w": jnp.ones((dim,), jnp.float32),
    }

    # Pre-transpose / fuse weights ONCE (kernel-friendly [K, N] layout).
    params = {
        "wqkv_t": jnp.concatenate([raw["wq"].T, raw["wk"].T, raw["wv"].T], axis=1),
        "wo_t": raw["wo"].T,
        "w1_t": raw["w1"].T,
        "w3_t": raw["w3"].T,
        "w2_t": raw["w2"].T,
        "attn_norm_w": raw["attn_norm_w"],
        "ffn_norm_w": raw["ffn_norm_w"],
    }

    x = jax.random.normal(ks[7], (B, S, dim), jnp.float32)

    # rotary frequencies (cos/sin of precompute_freqs_cis)
    theta = 10000.0
    freqs = 1.0 / (theta ** (jnp.arange(0, head_dim, 2, dtype=jnp.float32) / head_dim))
    t = jnp.arange(start_pos, start_pos + S, dtype=jnp.float32)
    angles = jnp.outer(t, freqs)              # [S, head_dim//2]
    cos, sin = jnp.cos(angles), jnp.sin(angles)

    fwd = jax.jit(functools.partial(transformer_block_forward,
                                    n_heads=n_heads, n_kv_heads=n_kv_heads,
                                    norm_eps=norm_eps),
                  static_argnames=("start_pos",))
    out = fwd(params, x, start_pos, cos, sin)
    out = jax.block_until_ready(out)

    assert out.shape == (B, S, dim)
    assert bool(jnp.all(jnp.isfinite(out)))

    ref = _reference_forward(raw, x, start_pos, cos, sin,
                             n_heads, n_kv_heads, norm_eps)
    assert bool(jnp.allclose(out, ref, rtol=1e-4, atol=1e-4)), (
        float(jnp.max(jnp.abs(out - ref))))
    print("KERNEL_OK")
</pallas_src>

<mosaic_0001>
module attributes {stable_mosaic.version = 11 : i64} {
  func.func @_norm_matmul_kernel(%arg0: i32, %arg1: memref<16x128xf32, #tpu.memory_space<vmem>>, %arg2: memref<1x128xf32, #tpu.memory_space<vmem>>, %arg3: memref<128x256xf32, #tpu.memory_space<vmem>>, %arg4: memref<16x256xf32, #tpu.memory_space<vmem>>) attributes {dimension_semantics = [#tpu.dimension_semantics<parallel>], iteration_bounds = array<i64: 1>, scalar_prefetch = 0 : i64, scratch_operands = 0 : i64, tpu.core_type = #tpu.core_type<tc>, window_params = [{transform_indices = @transform_0, window_bounds = array<i64: 16, 128>}, {pipeline_mode = #tpu.pipeline_mode<synchronous>, transform_indices = @transform_1, window_bounds = array<i64: 1, 128>}, {pipeline_mode = #tpu.pipeline_mode<synchronous>, transform_indices = @transform_2, window_bounds = array<i64: 128, 256>}, {transform_indices = @transform_3, window_bounds = array<i64: 16, 256>}]} {
    %c0 = arith.constant 0 : index
    %c0_0 = arith.constant 0 : index
    %0 = vector.load %arg1[%c0, %c0_0] : memref<16x128xf32, #tpu.memory_space<vmem>>, vector<16x128xf32>
    %1 = arith.mulf %0, %0 : vector<16x128xf32>
    %cst = arith.constant dense<0.000000e+00> : vector<16xf32>
    %2 = vector.multi_reduction <add>, %1, %cst [1] : vector<16x128xf32> to vector<16xf32>
    %3 = vector.shape_cast %2 : vector<16xf32> to vector<16x1xf32>
    %cst_1 = arith.constant 1.280000e+02 : f32
    %4 = vector.broadcast %cst_1 : f32 to vector<16x1xf32>
    %5 = arith.divf %3, %4 : vector<16x1xf32>
    %cst_2 = arith.constant 9.99999974E-6 : f32
    %6 = vector.broadcast %cst_2 : f32 to vector<16x1xf32>
    %7 = arith.addf %5, %6 : vector<16x1xf32>
    %8 = math.rsqrt %7 : vector<16x1xf32>
    %9 = vector.broadcast %8 : vector<16x1xf32> to vector<16x128xf32>
    %10 = arith.mulf %0, %9 : vector<16x128xf32>
    %c0_3 = arith.constant 0 : index
    %c0_4 = arith.constant 0 : index
    %11 = vector.load %arg2[%c0_3, %c0_4] : memref<1x128xf32, #tpu.memory_space<vmem>>, vector<1x128xf32>
    %12 = vector.broadcast %11 : vector<1x128xf32> to vector<16x128xf32>
    %13 = arith.mulf %10, %12 : vector<16x128xf32>
    %c0_5 = arith.constant 0 : index
    %c0_6 = arith.constant 0 : index
    %14 = vector.load %arg3[%c0_5, %c0_6] : memref<128x256xf32, #tpu.memory_space<vmem>>, vector<128x256xf32>
    %cst_7 = arith.constant dense<0.000000e+00> : vector<16x256xf32>
    %15 = tpu.matmul %13, %14, %cst_7 {dimension_numbers = #tpu.dot_dimension_numbers<[1], [0], [0], [1], [0, 0, 1, 1], [], []>} : vector<16x128xf32>, vector<128x256xf32>, vector<16x256xf32> -> vector<16x256xf32>
    %c0_8 = arith.constant 0 : index
    %c0_9 = arith.constant 0 : index
    %16 = vector.load %arg4[%c0_8, %c0_9] : memref<16x256xf32, #tpu.memory_space<vmem>>, vector<16x256xf32>
    tpu.vector_store %arg4[%c0_8, %c0_9], %15 {strides = array<i32>} : memref<16x256xf32, #tpu.memory_space<vmem>>, vector<16x256xf32>,
    return
  }
  func.func @transform_0(%arg0: i32) -> (i32, i32) {
    %c0_i32 = arith.constant 0 : i32
    %c0_i32_0 = arith.constant 0 : i32
    return %arg0, %c0_i32 : i32, i32
  }
  func.func @transform_1(%arg0: i32) -> (i32, i32) {
    %c0_i32 = arith.constant 0 : i32
    %c0_i32_0 = arith.constant 0 : i32
    %c0_i32_1 = arith.constant 0 : i32
    return %c0_i32, %c0_i32_0 : i32, i32
  }
  func.func @transform_2(%arg0: i32) -> (i32, i32) {
    %c0_i32 = arith.constant 0 : i32
    %c0_i32_0 = arith.constant 0 : i32
    %c0_i32_1 = arith.constant 0 : i32
    return %c0_i32, %c0_i32_0 : i32, i32
  }
  func.func @transform_3(%arg0: i32) -> (i32, i32) {
    %c0_i32 = arith.constant 0 : i32
    %c0_i32_0 = arith.constant 0 : i32
    return %arg0, %c0_i32 : i32, i32
  }
}

module attributes {stable_mosaic.version = 11 : i64} {
  func.func @_proj_add_kernel(%arg0: i32, %arg1: memref<16x128xf32, #tpu.memory_space<vmem>>, %arg2: memref<128x128xf32, #tpu.memory_space<vmem>>, %arg3: memref<16x128xf32, #tpu.memory_space<vmem>>, %arg4: memref<16x128xf32, #tpu.memory_space<vmem>>) attributes {dimension_semantics = [#tpu.dimension_semantics<parallel>], iteration_bounds = array<i64: 1>, scalar_prefetch = 0 : i64, scratch_operands = 0 : i64, tpu.core_type = #tpu.core_type<tc>, window_params = [{transform_indices = @transform_0, window_bounds = array<i64: 16, 128>}, {pipeline_mode = #tpu.pipeline_mode<synchronous>, transform_indices = @transform_1, window_bounds = array<i64: 128, 128>}, {transform_indices = @transform_2, window_bounds = array<i64: 16, 128>}, {transform_indices = @transform_3, window_bounds = array<i64: 16, 128>}]} {
    %c0 = arith.constant 0 : index
    %c0_0 = arith.constant 0 : index
    %0 = vector.load %arg1[%c0, %c0_0] : memref<16x128xf32, #tpu.memory_space<vmem>>, vector<16x128xf32>
    %c0_1 = arith.constant 0 : index
    %c0_2 = arith.constant 0 : index
    %1 = vector.load %arg2[%c0_1, %c0_2] : memref<128x128xf32, #tpu.memory_space<vmem>>, vector<128x128xf32>
    %cst = arith.constant dense<0.000000e+00> : vector<16x128xf32>
    %2 = tpu.matmul %0, %1, %cst {dimension_numbers = #tpu.dot_dimension_numbers<[1], [0], [0], [1], [0, 0, 1, 1], [], []>} : vector<16x128xf32>, vector<128x128xf32>, vector<16x128xf32> -> vector<16x128xf32>
    %c0_3 = arith.constant 0 : index
    %c0_4 = arith.constant 0 : index
    %3 = vector.load %arg3[%c0_3, %c0_4] : memref<16x128xf32, #tpu.memory_space<vmem>>, vector<16x128xf32>
    %4 = arith.addf %2, %3 : vector<16x128xf32>
    %c0_5 = arith.constant 0 : index
    %c0_6 = arith.constant 0 : index
    %5 = vector.load %arg4[%c0_5, %c0_6] : memref<16x128xf32, #tpu.memory_space<vmem>>, vector<16x128xf32>
    tpu.vector_store %arg4[%c0_5, %c0_6], %4 {strides = array<i32>} : memref<16x128xf32, #tpu.memory_space<vmem>>, vector<16x128xf32>,
    return
  }
  func.func @transform_0(%arg0: i32) -> (i32, i32) {
    %c0_i32 = arith.constant 0 : i32
    %c0_i32_0 = arith.constant 0 : i32
    return %arg0, %c0_i32 : i32, i32
  }
  func.func @transform_1(%arg0: i32) -> (i32, i32) {
    %c0_i32 = arith.constant 0 : i32
    %c0_i32_0 = arith.constant 0 : i32
    %c0_i32_1 = arith.constant 0 : i32
    return %c0_i32, %c0_i32_0 : i32, i32
  }
  func.func @transform_2(%arg0: i32) -> (i32, i32) {
    %c0_i32 = arith.constant 0 : i32
    %c0_i32_0 = arith.constant 0 : i32
    return %arg0, %c0_i32 : i32, i32
  }
  func.func @transform_3(%arg0: i32) -> (i32, i32) {
    %c0_i32 = arith.constant 0 : i32
    %c0_i32_0 = arith.constant 0 : i32
    return %arg0, %c0_i32 : i32, i32
  }
}

module attributes {stable_mosaic.version = 11 : i64} {
  func.func @_attention_kernel(%arg0: i32, %arg1: memref<1x8x4x32xf32, #tpu.memory_space<vmem>>, %arg2: memref<1x8x2x32xf32, #tpu.memory_space<vmem>>, %arg3: memref<1x8x2x32xf32, #tpu.memory_space<vmem>>, %arg4: memref<1x8x128xf32, #tpu.memory_space<vmem>>) attributes {dimension_semantics = [#tpu.dimension_semantics<parallel>], iteration_bounds = array<i64: 2>, scalar_prefetch = 0 : i64, scratch_operands = 0 : i64, tpu.core_type = #tpu.core_type<tc>, window_params = [{transform_indices = @transform_0, window_bounds = array<i64: 1, 8, 4, 32>}, {transform_indices = @transform_1, window_bounds = array<i64: 1, 8, 2, 32>}, {transform_indices = @transform_2, window_bounds = array<i64: 1, 8, 2, 32>}, {transform_indices = @transform_3, window_bounds = array<i64: 1, 8, 128>}]} {
    %c0 = arith.constant 0 : index
    %c0_0 = arith.constant 0 : index
    %c0_1 = arith.constant 0 : index
    %c0_2 = arith.constant 0 : index
    %0 = vector.load %arg1[%c0, %c0_0, %c0_1, %c0_2] : memref<1x8x4x32xf32, #tpu.memory_space<vmem>>, vector<1x8x4x32xf32>
    %1 = vector.shape_cast %0 : vector<1x8x4x32xf32> to vector<8x4x32xf32>
    %c0_3 = arith.constant 0 : index
    %c0_4 = arith.constant 0 : index
    %c0_5 = arith.constant 0 : index
    %c0_6 = arith.constant 0 : index
    %2 = vector.load %arg2[%c0_3, %c0_4, %c0_5, %c0_6] : memref<1x8x2x32xf32, #tpu.memory_space<vmem>>, vector<1x8x2x32xf32>
    %3 = vector.shape_cast %2 : vector<1x8x2x32xf32> to vector<8x2x32xf32>
    %c0_7 = arith.constant 0 : index
    %c0_8 = arith.constant 0 : index
    %c0_9 = arith.constant 0 : index
    %c0_10 = arith.constant 0 : index
    %4 = vector.load %arg3[%c0_7, %c0_8, %c0_9, %c0_10] : memref<1x8x2x32xf32, #tpu.memory_space<vmem>>, vector<1x8x2x32xf32>
    %5 = vector.shape_cast %4 : vector<1x8x2x32xf32> to vector<8x2x32xf32>
    %6 = tpu.iota {dimensions = array<i32: 0>} : vector<8x8xi32>
    %7 = tpu.iota {dimensions = array<i32: 1>} : vector<8x8xi32>
    %c0_i32 = arith.constant 0 : i32
    %8 = vector.broadcast %c0_i32 : i32 to vector<8x8xi32>
    %9 = arith.addi %6, %8 : vector<8x8xi32>
    %10 = arith.cmpi sle, %7, %9 : vector<8x8xi32>
    %11 = vector.extract_strided_slice %1 {offsets = [0, 0, 0], sizes = [8, 1, 32], strides = [1, 1, 1]} : vector<8x4x32xf32> to vector<8x1x32xf32>
    %12 = vector.shape_cast %11 : vector<8x1x32xf32> to vector<8x32xf32>
    %13 = vector.extract_strided_slice %3 {offsets = [0, 0, 0], sizes = [8, 1, 32], strides = [1, 1, 1]} : vector<8x2x32xf32> to vector<8x1x32xf32>
    %14 = vector.shape_cast %13 : vector<8x1x32xf32> to vector<8x32xf32>
    %15 = vector.extract_strided_slice %5 {offsets = [0, 0, 0], sizes = [8, 1, 32], strides = [1, 1, 1]} : vector<8x2x32xf32> to vector<8x1x32xf32>
    %16 = vector.shape_cast %15 : vector<8x1x32xf32> to vector<8x32xf32>
    %17 = tpu.transpose %14, [1, 0] : vector<8x32xf32> -> vector<32x8xf32>
    %cst = arith.constant dense<0.000000e+00> : vector<8x8xf32>
    %18 = tpu.matmul %12, %17, %cst {dimension_numbers = #tpu.dot_dimension_numbers<[1], [0], [0], [1], [0, 0, 1, 1], [], []>} : vector<8x32xf32>, vector<32x8xf32>, vector<8x8xf32> -> vector<8x8xf32>
    %cst_11 = arith.constant 0.176776692 : f32
    %19 = vector.broadcast %cst_11 : f32 to vector<8x8xf32>
    %20 = arith.mulf %18, %19 : vector<8x8xf32>
    %cst_12 = arith.constant -1.000000e+30 : f32
    %21 = vector.broadcast %cst_12 : f32 to vector<8x8xf32>
    %22 = arith.select %10, %20, %21 : vector<8x8xi1>, vector<8x8xf32>
    %cst_13 = arith.constant dense<0xFF800000> : vector<8xf32>
    %23 = vector.multi_reduction <maximumf>, %22, %cst_13 [1] : vector<8x8xf32> to vector<8xf32>
    %24 = vector.shape_cast %23 : vector<8xf32> to vector<8x1xf32>
    %25 = vector.broadcast %24 : vector<8x1xf32> to vector<8x8xf32>
    %26 = arith.subf %22, %25 : vector<8x8xf32>
    %27 = math.exp %26 : vector<8x8xf32>
    %cst_14 = arith.constant dense<0.000000e+00> : vector<8xf32>
    %28 = vector.multi_reduction <add>, %27, %cst_14 [1] : vector<8x8xf32> to vector<8xf32>
    %29 = vector.shape_cast %28 : vector<8xf32> to vector<8x1xf32>
    %30 = vector.broadcast %29 : vector<8x1xf32> to vector<8x8xf32>
    %31 = arith.divf %27, %30 : vector<8x8xf32>
    %cst_15 = arith.constant dense<0.000000e+00> : vector<8x32xf32>
    %32 = tpu.matmul %31, %16, %cst_15 {dimension_numbers = #tpu.dot_dimension_numbers<[1], [0], [0], [1], [0, 0, 1, 1], [], []>} : vector<8x8xf32>, vector<8x32xf32>, vector<8x32xf32> -> vector<8x32xf32>
    %33 = vector.extract_strided_slice %1 {offsets = [0, 1, 0], sizes = [8, 1, 32], strides = [1, 1, 1]} : vector<8x4x32xf32> to vector<8x1x32xf32>
    %34 = vector.shape_cast %33 : vector<8x1x32xf32> to vector<8x32xf32>
    %35 = vector.extract_strided_slice %3 {offsets = [0, 0, 0], sizes = [8, 1, 32], strides = [1, 1, 1]} : vector<8x2x32xf32> to vector<8x1x32xf32>
    %36 = vector.shape_cast %35 : vector<8x1x32xf32> to vector<8x32xf32>
    %37 = vector.extract_strided_slice %5 {offsets = [0, 0, 0], sizes = [8, 1, 32], strides = [1, 1, 1]} : vector<8x2x32xf32> to vector<8x1x32xf32>
    %38 = vector.shape_cast %37 : vector<8x1x32xf32> to vector<8x32xf32>
    %39 = tpu.transpose %36, [1, 0] : vector<8x32xf32> -> vector<32x8xf32>
    %cst_16 = arith.constant dense<0.000000e+00> : vector<8x8xf32>
    %40 = tpu.matmul %34, %39, %cst_16 {dimension_numbers = #tpu.dot_dimension_numbers<[1], [0], [0], [1], [0, 0, 1, 1], [], []>} : vector<8x32xf32>, vector<32x8xf32>, vector<8x8xf32> -> vector<8x8xf32>
    %cst_17 = arith.constant 0.176776692 : f32
    %41 = vector.broadcast %cst_17 : f32 to vector<8x8xf32>
    %42 = arith.mulf %40, %41 : vector<8x8xf32>
    %cst_18 = arith.constant -1.000000e+30 : f32
    %43 = vector.broadcast %cst_18 : f32 to vector<8x8xf32>
    %44 = arith.select %10, %42, %43 : vector<8x8xi1>, vector<8x8xf32>
    %cst_19 = arith.constant dense<0xFF800000> : vector<8xf32>
    %45 = vector.multi_reduction <maximumf>, %44, %cst_19 [1] : vector<8x8xf32> to vector<8xf32>
    %46 = vector.shape_cast %45 : vector<8xf32> to vector<8x1xf32>
    %47 = vector.broadcast %46 : vector<8x1xf32> to vector<8x8xf32>
    %48 = arith.subf %44, %47 : vector<8x8xf32>
    %49 = math.exp %48 : vector<8x8xf32>
    %cst_20 = arith.constant dense<0.000000e+00> : vector<8xf32>
    %50 = vector.multi_reduction <add>, %49, %cst_20 [1] : vector<8x8xf32> to vector<8xf32>
    %51 = vector.shape_cast %50 : vector<8xf32> to vector<8x1xf32>
    %52 = vector.broadcast %51 : vector<8x1xf32> to vector<8x8xf32>
    %53 = arith.divf %49, %52 : vector<8x8xf32>
    %cst_21 = arith.constant dense<0.000000e+00> : vector<8x32xf32>
    %54 = tpu.matmul %53, %38, %cst_21 {dimension_numbers = #tpu.dot_dimension_numbers<[1], [0], [0], [1], [0, 0, 1, 1], [], []>} : vector<8x8xf32>, vector<8x32xf32>, vector<8x32xf32> -> vector<8x32xf32>
    %55 = vector.extract_strided_slice %1 {offsets = [0, 2, 0], sizes = [8, 1, 32], strides = [1, 1, 1]} : vector<8x4x32xf32> to vector<8x1x32xf32>
    %56 = vector.shape_cast %55 : vector<8x1x32xf32> to vector<8x32xf32>
    %57 = vector.extract_strided_slice %3 {offsets = [0, 1, 0], sizes = [8, 1, 32], strides = [1, 1, 1]} : vector<8x2x32xf32> to vector<8x1x32xf32>
    %58 = vector.shape_cast %57 : vector<8x1x32xf32> to vector<8x32xf32>
    %59 = vector.extract_strided_slice %5 {offsets = [0, 1, 0], sizes = [8, 1, 32], strides = [1, 1, 1]} : vector<8x2x32xf32> to vector<8x1x32xf32>
    %60 = vector.shape_cast %59 : vector<8x1x32xf32> to vector<8x32xf32>
    %61 = tpu.transpose %58, [1, 0] : vector<8x32xf32> -> vector<32x8xf32>
    %cst_22 = arith.constant dense<0.000000e+00> : vector<8x8xf32>
    %62 = tpu.matmul %56, %61, %cst_22 {dimension_numbers = #tpu.dot_dimension_numbers<[1], [0], [0], [1], [0, 0, 1, 1], [], []>} : vector<8x32xf32>, vector<32x8xf32>, vector<8x8xf32> -> vector<8x8xf32>
    %cst_23 = arith.constant 0.176776692 : f32
    %63 = vector.broadcast %cst_23 : f32 to vector<8x8xf32>
    %64 = arith.mulf %62, %63 : vector<8x8xf32>
    %cst_24 = arith.constant -1.000000e+30 : f32
    %65 = vector.broadcast %cst_24 : f32 to vector<8x8xf32>
    %66 = arith.select %10, %64, %65 : vector<8x8xi1>, vector<8x8xf32>
    %cst_25 = arith.constant dense<0xFF800000> : vector<8xf32>
    %67 = vector.multi_reduction <maximumf>, %66, %cst_25 [1] : vector<8x8xf32> to vector<8xf32>
    %68 = vector.shape_cast %67 : vector<8xf32> to vector<8x1xf32>
    %69 = vector.broadcast %68 : vector<8x1xf32> to vector<8x8xf32>
    %70 = arith.subf %66, %69 : vector<8x8xf32>
    %71 = math.exp %70 : vector<8x8xf32>
    %cst_26 = arith.constant dense<0.000000e+00> : vector<8xf32>
    %72 = vector.multi_reduction <add>, %71, %cst_26 [1] : vector<8x8xf32> to vector<8xf32>
    %73 = vector.shape_cast %72 : vector<8xf32> to vector<8x1xf32>
    %74 = vector.broadcast %73 : vector<8x1xf32> to vector<8x8xf32>
    %75 = arith.divf %71, %74 : vector<8x8xf32>
    %cst_27 = arith.constant dense<0.000000e+00> : vector<8x32xf32>
    %76 = tpu.matmul %75, %60, %cst_27 {dimension_numbers = #tpu.dot_dimension_numbers<[1], [0], [0], [1], [0, 0, 1, 1], [], []>} : vector<8x8xf32>, vector<8x32xf32>, vector<8x32xf32> -> vector<8x32xf32>
    %77 = vector.extract_strided_slice %1 {offsets = [0, 3, 0], sizes = [8, 1, 32], strides = [1, 1, 1]} : vector<8x4x32xf32> to vector<8x1x32xf32>
    %78 = vector.shape_cast %77 : vector<8x1x32xf32> to vector<8x32xf32>
    %79 = vector.extract_strided_slice %3 {offsets = [0, 1, 0], sizes = [8, 1, 32], strides = [1, 1, 1]} : vector<8x2x32xf32> to vector<8x1x32xf32>
    %80 = vector.shape_cast %79 : vector<8x1x32xf32> to vector<8x32xf32>
    %81 = vector.extract_strided_slice %5 {offsets = [0, 1, 0], sizes = [8, 1, 32], strides = [1, 1, 1]} : vector<8x2x32xf32> to vector<8x1x32xf32>
    %82 = vector.shape_cast %81 : vector<8x1x32xf32> to vector<8x32xf32>
    %83 = tpu.transpose %80, [1, 0] : vector<8x32xf32> -> vector<32x8xf32>
    %cst_28 = arith.constant dense<0.000000e+00> : vector<8x8xf32>
    %84 = tpu.matmul %78, %83, %cst_28 {dimension_numbers = #tpu.dot_dimension_numbers<[1], [0], [0], [1], [0, 0, 1, 1], [], []>} : vector<8x32xf32>, vector<32x8xf32>, vector<8x8xf32> -> vector<8x8xf32>
    %cst_29 = arith.constant 0.176776692 : f32
    %85 = vector.broadcast %cst_29 : f32 to vector<8x8xf32>
    %86 = arith.mulf %84, %85 : vector<8x8xf32>
    %cst_30 = arith.constant -1.000000e+30 : f32
    %87 = vector.broadcast %cst_30 : f32 to vector<8x8xf32>
    %88 = arith.select %10, %86, %87 : vector<8x8xi1>, vector<8x8xf32>
    %cst_31 = arith.constant dense<0xFF800000> : vector<8xf32>
    %89 = vector.multi_reduction <maximumf>, %88, %cst_31 [1] : vector<8x8xf32> to vector<8xf32>
    %90 = vector.shape_cast %89 : vector<8xf32> to vector<8x1xf32>
    %91 = vector.broadcast %90 : vector<8x1xf32> to vector<8x8xf32>
    %92 = arith.subf %88, %91 : vector<8x8xf32>
    %93 = math.exp %92 : vector<8x8xf32>
    %cst_32 = arith.constant dense<0.000000e+00> : vector<8xf32>
    %94 = vector.multi_reduction <add>, %93, %cst_32 [1] : vector<8x8xf32> to vector<8xf32>
    %95 = vector.shape_cast %94 : vector<8xf32> to vector<8x1xf32>
    %96 = vector.broadcast %95 : vector<8x1xf32> to vector<8x8xf32>
    %97 = arith.divf %93, %96 : vector<8x8xf32>
    %cst_33 = arith.constant dense<0.000000e+00> : vector<8x32xf32>
    %98 = tpu.matmul %97, %82, %cst_33 {dimension_numbers = #tpu.dot_dimension_numbers<[1], [0], [0], [1], [0, 0, 1, 1], [], []>} : vector<8x8xf32>, vector<8x32xf32>, vector<8x32xf32> -> vector<8x32xf32>
    %99 = tpu.concatenate %32, %54, %76, %98 in 1 : vector<8x32xf32>, vector<8x32xf32>, vector<8x32xf32>, vector<8x32xf32> -> vector<8x128xf32>
    %c0_34 = arith.constant 0 : index
    %c0_35 = arith.constant 0 : index
    %c0_36 = arith.constant 0 : index
    %100 = vector.load %arg4[%c0_34, %c0_35, %c0_36] : memref<1x8x128xf32, #tpu.memory_space<vmem>>, vector<1x8x128xf32>
    %101 = vector.shape_cast %100 : vector<1x8x128xf32> to vector<8x128xf32>
    %102 = vector.shape_cast %99 : vector<8x128xf32> to vector<1x8x128xf32>
    tpu.vector_store %arg4[%c0_34, %c0_35, %c0_36], %102 {strides = array<i32>} : memref<1x8x128xf32, #tpu.memory_space<vmem>>, vector<1x8x128xf32>,
    return
  }
  func.func @transform_0(%arg0: i32) -> (i32, i32, i32, i32) {
    %c0_i32 = arith.constant 0 : i32
    %c0_i32_0 = arith.constant 0 : i32
    %c0_i32_1 = arith.constant 0 : i32
    %c0_i32_2 = arith.constant 0 : i32
    return %arg0, %c0_i32, %c0_i32_0, %c0_i32_1 : i32, i32, i32, i32
  }
  func.func @transform_1(%arg0: i32) -> (i32, i32, i32, i32) {
    %c0_i32 = arith.constant 0 : i32
    %c0_i32_0 = arith.constant 0 : i32
    %c0_i32_1 = arith.constant 0 : i32
    %c0_i32_2 = arith.constant 0 : i32
    return %arg0, %c0_i32, %c0_i32_0, %c0_i32_1 : i32, i32, i32, i32
  }
  func.func @transform_2(%arg0: i32) -> (i32, i32, i32, i32) {
    %c0_i32 = arith.constant 0 : i32
    %c0_i32_0 = arith.constant 0 : i32
    %c0_i32_1 = arith.constant 0 : i32
    %c0_i32_2 = arith.constant 0 : i32
    return %arg0, %c0_i32, %c0_i32_0, %c0_i32_1 : i32, i32, i32, i32
  }
  func.func @transform_3(%arg0: i32) -> (i32, i32, i32) {
    %c0_i32 = arith.constant 0 : i32
    %c0_i32_0 = arith.constant 0 : i32
    %c0_i32_1 = arith.constant 0 : i32
    return %arg0, %c0_i32, %c0_i32_0 : i32, i32, i32
  }
}

module attributes {stable_mosaic.version = 11 : i64} {
  func.func @_norm_ffn_add_kernel(%arg0: i32, %arg1: memref<16x128xf32, #tpu.memory_space<vmem>>, %arg2: memref<1x128xf32, #tpu.memory_space<vmem>>, %arg3: memref<128x512xf32, #tpu.memory_space<vmem>>, %arg4: memref<128x512xf32, #tpu.memory_space<vmem>>, %arg5: memref<512x128xf32, #tpu.memory_space<vmem>>, %arg6: memref<16x128xf32, #tpu.memory_space<vmem>>) attributes {dimension_semantics = [#tpu.dimension_semantics<parallel>], iteration_bounds = array<i64: 1>, scalar_prefetch = 0 : i64, scratch_operands = 0 : i64, tpu.core_type = #tpu.core_type<tc>, window_params = [{transform_indices = @transform_0, window_bounds = array<i64: 16, 128>}, {pipeline_mode = #tpu.pipeline_mode<synchronous>, transform_indices = @transform_1, window_bounds = array<i64: 1, 128>}, {pipeline_mode = #tpu.pipeline_mode<synchronous>, transform_indices = @transform_2, window_bounds = array<i64: 128, 512>}, {pipeline_mode = #tpu.pipeline_mode<synchronous>, transform_indices = @transform_3, window_bounds = array<i64: 128, 512>}, {pipeline_mode = #tpu.pipeline_mode<synchronous>, transform_indices = @transform_4, window_bounds = array<i64: 512, 128>}, {transform_indices = @transform_5, window_bounds = array<i64: 16, 128>}]} {
    %c0 = arith.constant 0 : index
    %c0_0 = arith.constant 0 : index
    %0 = vector.load %arg1[%c0, %c0_0] : memref<16x128xf32, #tpu.memory_space<vmem>>, vector<16x128xf32>
    %1 = arith.mulf %0, %0 : vector<16x128xf32>
    %cst = arith.constant dense<0.000000e+00> : vector<16xf32>
    %2 = vector.multi_reduction <add>, %1, %cst [1] : vector<16x128xf32> to vector<16xf32>
    %3 = vector.shape_cast %2 : vector<16xf32> to vector<16x1xf32>
    %cst_1 = arith.constant 1.280000e+02 : f32
    %4 = vector.broadcast %cst_1 : f32 to vector<16x1xf32>
    %5 = arith.divf %3, %4 : vector<16x1xf32>
    %cst_2 = arith.constant 9.99999974E-6 : f32
    %6 = vector.broadcast %cst_2 : f32 to vector<16x1xf32>
    %7 = arith.addf %5, %6 : vector<16x1xf32>
    %8 = math.rsqrt %7 : vector<16x1xf32>
    %9 = vector.broadcast %8 : vector<16x1xf32> to vector<16x128xf32>
    %10 = arith.mulf %0, %9 : vector<16x128xf32>
    %c0_3 = arith.constant 0 : index
    %c0_4 = arith.constant 0 : index
    %11 = vector.load %arg2[%c0_3, %c0_4] : memref<1x128xf32, #tpu.memory_space<vmem>>, vector<1x128xf32>
    %12 = vector.broadcast %11 : vector<1x128xf32> to vector<16x128xf32>
    %13 = arith.mulf %10, %12 : vector<16x128xf32>
    %c0_5 = arith.constant 0 : index
    %c0_6 = arith.constant 0 : index
    %14 = vector.load %arg3[%c0_5, %c0_6] : memref<128x512xf32, #tpu.memory_space<vmem>>, vector<128x512xf32>
    %cst_7 = arith.constant dense<0.000000e+00> : vector<16x512xf32>
    %15 = tpu.matmul %13, %14, %cst_7 {dimension_numbers = #tpu.dot_dimension_numbers<[1], [0], [0], [1], [0, 0, 1, 1], [], []>} : vector<16x128xf32>, vector<128x512xf32>, vector<16x512xf32> -> vector<16x512xf32>
    %c0_8 = arith.constant 0 : index
    %c0_9 = arith.constant 0 : index
    %16 = vector.load %arg4[%c0_8, %c0_9] : memref<128x512xf32, #tpu.memory_space<vmem>>, vector<128x512xf32>
    %cst_10 = arith.constant dense<0.000000e+00> : vector<16x512xf32>
    %17 = tpu.matmul %13, %16, %cst_10 {dimension_numbers = #tpu.dot_dimension_numbers<[1], [0], [0], [1], [0, 0, 1, 1], [], []>} : vector<16x128xf32>, vector<128x512xf32>, vector<16x512xf32> -> vector<16x512xf32>
    %18 = arith.negf %15 : vector<16x512xf32>
    %19 = math.exp %18 : vector<16x512xf32>
    %cst_11 = arith.constant 1.000000e+00 : f32
    %20 = vector.broadcast %cst_11 : f32 to vector<16x512xf32>
    %21 = arith.addf %20, %19 : vector<16x512xf32>
    %22 = arith.divf %20, %21 : vector<16x512xf32>
    %23 = arith.mulf %15, %22 : vector<16x512xf32>
    %24 = arith.mulf %23, %17 : vector<16x512xf32>
    %c0_12 = arith.constant 0 : index
    %c0_13 = arith.constant 0 : index
    %25 = vector.load %arg5[%c0_12, %c0_13] : memref<512x128xf32, #tpu.memory_space<vmem>>, vector<512x128xf32>
    %cst_14 = arith.constant dense<0.000000e+00> : vector<16x128xf32>
    %26 = tpu.matmul %24, %25, %cst_14 {dimension_numbers = #tpu.dot_dimension_numbers<[1], [0], [0], [1], [0, 0, 1, 1], [], []>} : vector<16x512xf32>, vector<512x128xf32>, vector<16x128xf32> -> vector<16x128xf32>
    %27 = arith.addf %0, %26 : vector<16x128xf32>
    %c0_15 = arith.constant 0 : index
    %c0_16 = arith.constant 0 : index
    %28 = vector.load %arg6[%c0_15, %c0_16] : memref<16x128xf32, #tpu.memory_space<vmem>>, vector<16x128xf32>
    tpu.vector_store %arg6[%c0_15, %c0_16], %27 {strides = array<i32>} : memref<16x128xf32, #tpu.memory_space<vmem>>, vector<16x128xf32>,
    return
  }
  func.func @transform_0(%arg0: i32) -> (i32, i32) {
    %c0_i32 = arith.constant 0 : i32
    %c0_i32_0 = arith.constant 0 : i32
    return %arg0, %c0_i32 : i32, i32
  }
  func.func @transform_1(%arg0: i32) -> (i32, i32) {
    %c0_i32 = arith.constant 0 : i32
    %c0_i32_0 = arith.constant 0 : i32
    %c0_i32_1 = arith.constant 0 : i32
    return %c0_i32, %c0_i32_0 : i32, i32
  }
  func.func @transform_2(%arg0: i32) -> (i32, i32) {
    %c0_i32 = arith.constant 0 : i32
    %c0_i32_0 = arith.constant 0 : i32
    %c0_i32_1 = arith.constant 0 : i32
    return %c0_i32, %c0_i32_0 : i32, i32
  }
  func.func @transform_3(%arg0: i32) -> (i32, i32) {
    %c0_i32 = arith.constant 0 : i32
    %c0_i32_0 = arith.constant 0 : i32
    %c0_i32_1 = arith.constant 0 : i32
    return %c0_i32, %c0_i32_0 : i32, i32
  }
  func.func @transform_4(%arg0: i32) -> (i32, i32) {
    %c0_i32 = arith.constant 0 : i32
    %c0_i32_0 = arith.constant 0 : i32
    %c0_i32_1 = arith.constant 0 : i32
    return %c0_i32, %c0_i32_0 : i32, i32
  }
  func.func @transform_5(%arg0: i32) -> (i32, i32) {
    %c0_i32 = arith.constant 0 : i32
    %c0_i32_0 = arith.constant 0 : i32
    return %arg0, %c0_i32 : i32, i32
  }
}

</mosaic_0001>

<llo_original>
// kernel: transformer_block_forward.4
$region0: #{transformer_block_forward.4}
  #allocation0 [shape = 'u32[]', space=smem, size = 0x4, offset = 0x4, fixed_abs, tag = 'smem constant byte address 0x4 - core index']
  #allocation1 [shape = 'u32[144,128]{1,0:T(1,128)}', space=vmem, size = 0x12000, scoped, tag = 'internal scratch']
  %s0 = inlined_call_operand.vmem [shape: f32[16,128], index: 0, kind: input, shape index: {}]
  %s1 = inlined_call_operand.vmem [shape: f32[1,128], index: 1, kind: input, shape index: {}]
  %s2 = inlined_call_operand.hbm [shape: f32[128,256], index: 2, kind: input, shape index: {}]
  %s3 = inlined_call_operand.vmem [shape: f32[16,256], index: 3, kind: output, shape index: {}]
  %s4 = sld [smem:[#allocation0]]
  $region26: #{transformer_block_forward.4} parent=0
    _
  %s6 = ssub.s32 1, %s4
  %s7 = scalar_select 0, %s6, %s4
  $region1: #{transformer_block_forward.4} parent=0
    #allocation2 [shape = 'u8[131072]{0}', space=vmem, size = 0x20000, scoped, tag = 'input window, operand 2, single buffered']
    #allocation3 [shape = 's32[1]{0}', space=sflag, size = 0x4, scoped, tag = 'scoped memory for transformer_block_forward.4']
    %8 = vsyncpa [#allocation3], 0
    // Predicated region
    $region2: #{transformer_block_forward.4} parent=1 // pred_check
      _
    $region3: #{transformer_block_forward.4} parent=1 // pred_check_branch
      %10 = sbr.rel (0) target = $region5
    $region4: #{transformer_block_forward.4} parent=1 // pred_region
      _
    $region5: #{transformer_block_forward.4} parent=1 // pred_fallthru
      _
    // Predicated region
    $region6: #{transformer_block_forward.4} parent=1 // pred_check
      _
    $region7: #{transformer_block_forward.4} parent=1 // pred_check_branch
      %12 = sbr.rel (0) target = $region9
    $region8: #{transformer_block_forward.4} parent=1 // pred_region
      _
    $region9: #{transformer_block_forward.4} parent=1 // pred_fallthru
      _
    // Predicated region
    $region10: #{transformer_block_forward.4} parent=1 // pred_check
      _
    $region11: #{transformer_block_forward.4} parent=1 // pred_check_branch
      %14 = sbr.rel (0) target = $region13
    $region12: #{transformer_block_forward.4} parent=1 // pred_region
      %s16 = ssub.s32 4096, 4096
      %17 = vsyncadd [#allocation3], %s16
      %s18 = sshll.u32 [#allocation2], 4
      %s19 = int_to_ptr.vmem [resolvable:$true] %s18
      %24 = dma.hbm_to_vmem [thread:$0]  %s2, 4096, %s19, [#allocation3], 256, 256, 16
    $region13: #{transformer_block_forward.4} parent=1 // pred_fallthru
      _
    // Predicated region
    $region14: #{transformer_block_forward.4} parent=1 // pred_check
      _
    $region15: #{transformer_block_forward.4} parent=1 // pred_check_branch
      %26 = sbr.rel (0) target = $region17
    $region16: #{transformer_block_forward.4} parent=1 // pred_region
      %27 = dma.done [#allocation3], 4096
    $region17: #{transformer_block_forward.4} parent=1 // pred_fallthru
      _
    %v28 = vld [vmem:[%s0] sm:$0xff]
    %v29 = vld [vmem:[%s0 + $0x8] sm:$0xff]
    %v30 = vmul.f32 %v28, %v28
    %v31 = vmul.f32 %v29, %v29
    %32 = vadd.xlane.f32.xlu0 %v30
    %v33 = vpop.xlane.xlu0 %32
    %34 = vadd.xlane.f32.xlu0 %v31
    %v35 = vpop.xlane.xlu0 %34
    %v36 = vrcp.pop 128.0
    %v37 = vmul.f32 %v33, %v36
    %v38 = vmul.f32 %v35, %v36
    %v39 = vadd.f32 %v37, 1e-05
    %v40 = vadd.f32 %v38, 1e-05
    %v41 = vrsqrt.pop %v39
    %v42 = vrsqrt.pop %v40
    %v43 = vmul.f32 %v28, %v41
    %v44 = vmul.f32 %v29, %v42
    %v45 = vld [vmem:[%s1] sm:$0x1]
    %v47 = vlaneseq
    %v48 = vshrl.u32 %v47, 7
    %v49 = vsub.s32 0, %v48
    %v50 = vrot.slane %v45, %v49
    %v52 = vmul.f32 %v43, %v50
    %v53 = vmul.f32 %v44, %v50
    %v54 = vld [vmem:[#allocation2] sm:$0xff]
    %v55 = vld [vmem:[#allocation2 + $0x8] sm:$0xff]
    %v56 = vld [vmem:[#allocation2 + $0x10] sm:$0xff]
    %v57 = vld [vmem:[#allocation2 + $0x18] sm:$0xff]
    %v58 = vld [vmem:[#allocation2 + $0x20] sm:$0xff]
    %v59 = vld [vmem:[#allocation2 + $0x28] sm:$0xff]
    %v60 = vld [vmem:[#allocation2 + $0x30] sm:$0xff]
    %v61 = vld [vmem:[#allocation2 + $0x38] sm:$0xff]
    %v62 = vld [vmem:[#allocation2 + $0x40] sm:$0xff]
    %v63 = vld [vmem:[#allocation2 + $0x48] sm:$0xff]
    %v64 = vld [vmem:[#allocation2 + $0x50] sm:$0xff]
    %v65 = vld [vmem:[#allocation2 + $0x58] sm:$0xff]
    %v66 = vld [vmem:[#allocation2 + $0x60] sm:$0xff]
    %v67 = vld [vmem:[#allocation2 + $0x68] sm:$0xff]
    %v68 = vld [vmem:[#allocation2 + $0x70] sm:$0xff]
    %v69 = vld [vmem:[#allocation2 + $0x78] sm:$0xff]
    %v70 = vld [vmem:[#allocation2 + $0x80] sm:$0xff]
    %v71 = vld [vmem:[#allocation2 + $0x88] sm:$0xff]
    %v72 = vld [vmem:[#allocation2 + $0x90] sm:$0xff]
    %v73 = vld [vmem:[#allocation2 + $0x98] sm:$0xff]
    %v74 = vld [vmem:[#allocation2 + $0xa0] sm:$0xff]
    %v75 = vld [vmem:[#allocation2 + $0xa8] sm:$0xff]
    %v76 = vld [vmem:[#allocation2 + $0xb0] sm:$0xff]
    %v77 = vld [vmem:[#allocation2 + $0xb8] sm:$0xff]
    %v78 = vld [vmem:[#allocation2 + $0xc0] sm:$0xff]
    %v79 = vld [vmem:[#allocation2 + $0xc8] sm:$0xff]
    %v80 = vld [vmem:[#allocation2 + $0xd0] sm:$0xff]
    %v81 = vld [vmem:[#allocation2 + $0xd8] sm:$0xff]
    %v82 = vld [vmem:[#allocation2 + $0xe0] sm:$0xff]
    %v83 = vld [vmem:[#allocation2 + $0xe8] sm:$0xff]
    %v84 = vld [vmem:[#allocation2 + $0xf0] sm:$0xff]
    %v85 = vld [vmem:[#allocation2 + $0xf8] sm:$0xff]
    %86 = vmatprep.subr.mxu0 %v85
    %87 = vmatpush1.msra.mxu0 %v84
    %88 = vmatprep.subr.mxu0 %v83
    %89 = vmatpush1.msra.mxu0 %v82
    %90 = vmatprep.subr.mxu0 %v81
    %91 = vmatpush1.msra.mxu0 %v80
    %92 = vmatprep.subr.mxu0 %v79
    %93 = vmatpush1.msra.mxu0 %v78
    %94 = vmatprep.subr.mxu0 %v77
    %95 = vmatpush1.msra.mxu0 %v76
    %96 = vmatprep.subr.mxu0 %v75
    %97 = vmatpush1.msra.mxu0 %v74
    %98 = vmatprep.subr.mxu0 %v73
    %99 = vmatpush1.msra.mxu0 %v72
    %100 = vmatprep.subr.mxu0 %v71
    %101 = vmatpush1.msra.mxu0 %v70
    %102 = vmatprep.subr.mxu0 %v69
    %103 = vmatpush1.msra.mxu0 %v68
    %104 = vmatprep.subr.mxu0 %v67
    %105 = vmatpush1.msra.mxu0 %v66
    %106 = vmatprep.subr.mxu0 %v65
    %107 = vmatpush1.msra.mxu0 %v64
    %108 = vmatprep.subr.mxu0 %v63
    %109 = vmatpush1.msra.mxu0 %v62
    %110 = vmatprep.subr.mxu0 %v61
    %111 = vmatpush1.msra.mxu0 %v60
    %112 = vmatprep.subr.mxu0 %v59
    %113 = vmatpush1.msra.mxu0 %v58
    %114 = vmatprep.subr.mxu0 %v57
    %115 = vmatpush1.msra.mxu0 %v56
    %116 = vmatprep.subr.mxu0 %v55
    %117 = vmatpush1.msra.mxu0 %v54
    %118 = vmatprep.subr.mxu0 0.0
    %119 = vmatpush2.msra.mxu0 0.0
    %120 = vmatprep.subr.mxu0 0.0
    %121 = vmatpush2.msra.mxu0 0.0
    %122 = vmatprep.subr.mxu0 0.0
    %123 = vmatpush2.msra.mxu0 0.0
    %124 = vmatprep.subr.mxu0 0.0
    %125 = vmatpush2.msra.mxu0 0.0
    %126 = vmatprep.subr.mxu0 0.0
    %127 = vmatpush2.msra.mxu0 0.0
    %128 = vmatprep.subr.mxu0 0.0
    %129 = vmatpush2.msra.mxu0 0.0
    %130 = vmatprep.subr.mxu0 0.0
    %131 = vmatpush2.msra.mxu0 0.0
    %132 = vmatprep.subr.mxu0 0.0
    %133 = vmatpush2.msra.mxu0 0.0
    %134 = vmatprep.subr.mxu0 0.0
    %135 = vmatpush2.msra.mxu0 0.0
    %136 = vmatprep.subr.mxu0 0.0
    %137 = vmatpush2.msra.mxu0 0.0
    %138 = vmatprep.subr.mxu0 0.0
    %139 = vmatpush2.msra.mxu0 0.0
    %140 = vmatprep.subr.mxu0 0.0
    %141 = vmatpush2.msra.mxu0 0.0
    %142 = vmatprep.subr.mxu0 0.0
    %143 = vmatpush2.msra.mxu0 0.0
    %144 = vmatprep.subr.mxu0 0.0
    %145 = vmatpush2.msra.mxu0 0.0
    %146 = vmatprep.subr.mxu0 0.0
    %147 = vmatpush2.msra.mxu0 0.0
    %148 = vmatprep.subr.mxu0 0.0
    %149 = vmatpush2.msra.mxu0 0.0
    %150 = vmatprep.mubr.f32.mxu0 0.0
    %151 = vmatmul.mubr.f32.gmra.mxu0 %v52
    %v152 = vpop.f32.mrf.mxu0
    %v153 = vadd.f32 0.0, %v152
    %v154 = vpop.f32.mrf.mxu0
    %v155 = vadd.f32 0.0, %v154
    %156 = vmatprep.mubr.f32.mxu0 0.0
    %157 = vmatmul.mubr.f32.gmra.mxu0 %v53
    %v158 = vpop.f32.mrf.mxu0
    %v159 = vadd.f32 0.0, %v158
    %v160 = vpop.f32.mrf.mxu0
    %v161 = vadd.f32 0.0, %v160
    %162 = vdwg.mxu0
    %163 = vst [vmem:[%s3] sm:$0xff] %v153
    %164 = vst [vmem:[%s3 + $0x8] sm:$0xff] %v155
    %165 = vst [vmem:[%s3 + $0x10] sm:$0xff] %v159
    %166 = vst [vmem:[%s3 + $0x18] sm:$0xff] %v161
    // Predicated region
    $region18: #{transformer_block_forward.4} parent=1 // pred_check
      _
    $region19: #{transformer_block_forward.4} parent=1 // pred_check_branch
      %168 = sbr.rel (0) target = $region21
    $region20: #{transformer_block_forward.4} parent=1 // pred_region
      _
    $region21: #{transformer_block_forward.4} parent=1 // pred_fallthru
      _
    // Predicated region
    $region22: #{transformer_block_forward.4} parent=1 // pred_check
      _
    $region23: #{transformer_block_forward.4} parent=1 // pred_check_branch
      %170 = sbr.rel (0) target = $region25
    $region24: #{transformer_block_forward.4} parent=1 // pred_region
      _
    $region25: #{transformer_block_forward.4} parent=1 // pred_fallthru
      _
    %171 = vsyncpa [#allocation3], 1

// kernel: transformer_block_forward.6
$region0: #{transformer_block_forward.6}
  #allocation0 [shape = 'u32[]', space=smem, size = 0x4, offset = 0x4, fixed_abs, tag = 'smem constant byte address 0x4 - core index']
  #allocation1 [shape = 'u32[144,128]{1,0:T(1,128)}', space=vmem, size = 0x12000, scoped, tag = 'internal scratch']
  %s0 = inlined_call_operand.vmem [shape: f32[16,128], index: 0, kind: input, shape index: {}]
  %s1 = inlined_call_operand.vmem [shape: f32[128,128], index: 1, kind: input, shape index: {}]
  %s2 = inlined_call_operand.vmem [shape: f32[16,128], index: 2, kind: input, shape index: {}]
  %s3 = inlined_call_operand.vmem [shape: f32[16,128], index: 3, kind: output, shape index: {}]
  %s4 = sld [smem:[#allocation0]]
  $region22: #{transformer_block_forward.6} parent=0
    _
  %s6 = ssub.s32 1, %s4
  %s7 = scalar_select 0, %s6, %s4
  // Predicated region
  $region2: #{transformer_block_forward.6} parent=0 // pred_check
    _
  $region3: #{transformer_block_forward.6} parent=0 // pred_check_branch
    %9 = sbr.rel (0) target = $region5
  $region4: #{transformer_block_forward.6} parent=0 // pred_region
    _
  $region5: #{transformer_block_forward.6} parent=0 // pred_fallthru
    _
  // Predicated region
  $region6: #{transformer_block_forward.6} parent=0 // pred_check
    _
  $region7: #{transformer_block_forward.6} parent=0 // pred_check_branch
    %11 = sbr.rel (0) target = $region9
  $region8: #{transformer_block_forward.6} parent=0 // pred_region
    _
  $region9: #{transformer_block_forward.6} parent=0 // pred_fallthru
    _
  // Predicated region
  $region10: #{transformer_block_forward.6} parent=0 // pred_check
    _
  $region11: #{transformer_block_forward.6} parent=0 // pred_check_branch
    %13 = sbr.rel (0) target = $region13
  $region12: #{transformer_block_forward.6} parent=0 // pred_region
    _
  $region13: #{transformer_block_forward.6} parent=0 // pred_fallthru
    _
  %v14 = vld [vmem:[%s0] sm:$0xff]
  %v15 = vld [vmem:[%s0 + $0x8] sm:$0xff]
  %v16 = vld [vmem:[%s1] sm:$0xff]
  %v17 = vld [vmem:[%s1 + $0x8] sm:$0xff]
  %v18 = vld [vmem:[%s1 + $0x10] sm:$0xff]
  %v19 = vld [vmem:[%s1 + $0x18] sm:$0xff]
  %v20 = vld [vmem:[%s1 + $0x20] sm:$0xff]
  %v21 = vld [vmem:[%s1 + $0x28] sm:$0xff]
  %v22 = vld [vmem:[%s1 + $0x30] sm:$0xff]
  %v23 = vld [vmem:[%s1 + $0x38] sm:$0xff]
  %v24 = vld [vmem:[%s1 + $0x40] sm:$0xff]
  %v25 = vld [vmem:[%s1 + $0x48] sm:$0xff]
  %v26 = vld [vmem:[%s1 + $0x50] sm:$0xff]
  %v27 = vld [vmem:[%s1 + $0x58] sm:$0xff]
  %v28 = vld [vmem:[%s1 + $0x60] sm:$0xff]
  %v29 = vld [vmem:[%s1 + $0x68] sm:$0xff]
  %v30 = vld [vmem:[%s1 + $0x70] sm:$0xff]
  %v31 = vld [vmem:[%s1 + $0x78] sm:$0xff]
  %v32 = vld [vmem:[%s2] sm:$0xff]
  %v33 = vld [vmem:[%s2 + $0x8] sm:$0xff]
  %34 = vmatprep.subr.mxu0 0.0
  %35 = vmatpush1.msra.mxu0 %v31
  %36 = vmatprep.subr.mxu0 0.0
  %37 = vmatpush1.msra.mxu0 %v30
  %38 = vmatprep.subr.mxu0 0.0
  %39 = vmatpush1.msra.mxu0 %v29
  %40 = vmatprep.subr.mxu0 0.0
  %41 = vmatpush1.msra.mxu0 %v28
  %42 = vmatprep.subr.mxu0 0.0
  %43 = vmatpush1.msra.mxu0 %v27
  %44 = vmatprep.subr.mxu0 0.0
  %45 = vmatpush1.msra.mxu0 %v26
  %46 = vmatprep.subr.mxu0 0.0
  %47 = vmatpush1.msra.mxu0 %v25
  %48 = vmatprep.subr.mxu0 0.0
  %49 = vmatpush1.msra.mxu0 %v24
  %50 = vmatprep.subr.mxu0 0.0
  %51 = vmatpush1.msra.mxu0 %v23
  %52 = vmatprep.subr.mxu0 0.0
  %53 = vmatpush1.msra.mxu0 %v22
  %54 = vmatprep.subr.mxu0 0.0
  %55 = vmatpush1.msra.mxu0 %v21
  %56 = vmatprep.subr.mxu0 0.0
  %57 = vmatpush1.msra.mxu0 %v20
  %58 = vmatprep.subr.mxu0 0.0
  %59 = vmatpush1.msra.mxu0 %v19
  %60 = vmatprep.subr.mxu0 0.0
  %61 = vmatpush1.msra.mxu0 %v18
  %62 = vmatprep.subr.mxu0 0.0
  %63 = vmatpush1.msra.mxu0 %v17
  %64 = vmatprep.subr.mxu0 0.0
  %65 = vmatpush1.msra.mxu0 %v16
  %66 = vmatprep.subr.mxu0 0.0
  %67 = vmatpush2.msra.mxu0 0.0
  %68 = vmatprep.subr.mxu0 0.0
  %69 = vmatpush2.msra.mxu0 0.0
  %70 = vmatprep.subr.mxu0 0.0
  %71 = vmatpush2.msra.mxu0 0.0
  %72 = vmatprep.subr.mxu0 0.0
  %73 = vmatpush2.msra.mxu0 0.0
  %74 = vmatprep.subr.mxu0 0.0
  %75 = vmatpush2.msra.mxu0 0.0
  %76 = vmatprep.subr.mxu0 0.0
  %77 = vmatpush2.msra.mxu0 0.0
  %78 = vmatprep.subr.mxu0 0.0
  %79 = vmatpush2.msra.mxu0 0.0
  %80 = vmatprep.subr.mxu0 0.0
  %81 = vmatpush2.msra.mxu0 0.0
  %82 = vmatprep.subr.mxu0 0.0
  %83 = vmatpush2.msra.mxu0 0.0
  %84 = vmatprep.subr.mxu0 0.0
  %85 = vmatpush2.msra.mxu0 0.0
  %86 = vmatprep.subr.mxu0 0.0
  %87 = vmatpush2.msra.mxu0 0.0
  %88 = vmatprep.subr.mxu0 0.0
  %89 = vmatpush2.msra.mxu0 0.0
  %90 = vmatprep.subr.mxu0 0.0
  %91 = vmatpush2.msra.mxu0 0.0
  %92 = vmatprep.subr.mxu0 0.0
  %93 = vmatpush2.msra.mxu0 0.0
  %94 = vmatprep.subr.mxu0 0.0
  %95 = vmatpush2.msra.mxu0 0.0
  %96 = vmatprep.subr.mxu0 0.0
  %97 = vmatpush2.msra.mxu0 0.0
  %98 = vmatprep.mubr.f32.mxu0 0.0
  %99 = vmatmul.mubr.f32.gmra.mxu0 %v14
  %v100 = vpop.f32.mrf.mxu0
  %v101 = vadd.f32 %v32, %v100
  %v102 = vpop.f32.mrf.mxu0
  %103 = vmatprep.mubr.f32.mxu0 0.0
  %104 = vmatmul.mubr.f32.gmra.mxu0 %v15
  %v105 = vpop.f32.mrf.mxu0
  %v106 = vadd.f32 %v33, %v105
  %v107 = vpop.f32.mrf.mxu0
  %108 = vdwg.mxu0
  %109 = vst [vmem:[%s3] sm:$0xff] %v101
  %110 = vst [vmem:[%s3 + $0x8] sm:$0xff] %v106
  // Predicated region
  $region14: #{transformer_block_forward.6} parent=0 // pred_check
    _
  $region15: #{transformer_block_forward.6} parent=0 // pred_check_branch
    %112 = sbr.rel (0) target = $region17
  $region16: #{transformer_block_forward.6} parent=0 // pred_region
    _
  $region17: #{transformer_block_forward.6} parent=0 // pred_fallthru
    _
  // Predicated region
  $region18: #{transformer_block_forward.6} parent=0 // pred_check
    _
  $region19: #{transformer_block_forward.6} parent=0 // pred_check_branch
    %114 = sbr.rel (0) target = $region21
  $region20: #{transformer_block_forward.6} parent=0 // pred_region
    _
  $region21: #{transformer_block_forward.6} parent=0 // pred_fallthru
    _

// kernel: transformer_block_forward.7
$region0: #{transformer_block_forward.7}
  #allocation0 [shape = 'u32[]', space=smem, size = 0x4, offset = 0x4, fixed_abs, tag = 'smem constant byte address 0x4 - core index']
  #allocation1 [shape = 'u32[144,128]{1,0:T(1,128)}', space=vmem, size = 0x12000, scoped, tag = 'internal scratch']
  %s0 = inlined_call_operand.vmem [shape: f32[16,128], index: 0, kind: input, shape index: {}]
  %s1 = inlined_call_operand.vmem [shape: f32[1,128], index: 1, kind: input, shape index: {}]
  %s2 = inlined_call_operand.vmem [shape: f32[128,512], index: 2, kind: input, shape index: {}]
  %s3 = inlined_call_operand.vmem [shape: f32[128,512], index: 3, kind: input, shape index: {}]
  %s4 = inlined_call_operand.vmem [shape: f32[512,128], index: 4, kind: input, shape index: {}]
  %s5 = inlined_call_operand.hbm [shape: f32[16,128], index: 5, kind: output, shape index: {}]
  %s6 = sld [smem:[#allocation0]]
  $region30: #{transformer_block_forward.7} parent=0
    _
  %s8 = ssub.s32 1, %s6
  %s9 = scalar_select 0, %s8, %s6
  $region1: #{transformer_block_forward.7} parent=0
    #allocation2 [shape = 'u8[8192]{0}', space=vmem, size = 0x2000, scoped, tag = 'output window, operand 0, single buffered']
    #allocation3 [shape = 's32[1]{0}', space=sflag, size = 0x4, scoped, tag = 'scoped memory for transformer_block_forward.7']
    %10 = vsyncpa [#allocation3], 0
    // Predicated region
    $region2: #{transformer_block_forward.7} parent=1 // pred_check
      _
    $region3: #{transformer_block_forward.7} parent=1 // pred_check_branch
      %12 = sbr.rel (0) target = $region5
    $region4: #{transformer_block_forward.7} parent=1 // pred_region
      _
    $region5: #{transformer_block_forward.7} parent=1 // pred_fallthru
      _
    // Predicated region
    $region6: #{transformer_block_forward.7} parent=1 // pred_check
      _
    $region7: #{transformer_block_forward.7} parent=1 // pred_check_branch
      %14 = sbr.rel (0) target = $region9
    $region8: #{transformer_block_forward.7} parent=1 // pred_region
      _
    $region9: #{transformer_block_forward.7} parent=1 // pred_fallthru
      _
    // Predicated region
    $region10: #{transformer_block_forward.7} parent=1 // pred_check
      _
    $region11: #{transformer_block_forward.7} parent=1 // pred_check_branch
      %16 = sbr.rel (0) target = $region13
    $region12: #{transformer_block_forward.7} parent=1 // pred_region
      _
    $region13: #{transformer_block_forward.7} parent=1 // pred_fallthru
      _
    // Predicated region
    $region14: #{transformer_block_forward.7} parent=1 // pred_check
      _
    $region15: #{transformer_block_forward.7} parent=1 // pred_check_branch
      %18 = sbr.rel (0) target = $region17
    $region16: #{transformer_block_forward.7} parent=1 // pred_region
      _
    $region17: #{transformer_block_forward.7} parent=1 // pred_fallthru
      _
    // Predicated region
    $region18: #{transformer_block_forward.7} parent=1 // pred_check
      _
    $region19: #{transformer_block_forward.7} parent=1 // pred_check_branch
      %20 = sbr.rel (0) target = $region21
    $region20: #{transformer_block_forward.7} parent=1 // pred_region
      _
    $region21: #{transformer_block_forward.7} parent=1 // pred_fallthru
      _
    %v21 = vld [vmem:[%s0] sm:$0xff]
    %v22 = vld [vmem:[%s0 + $0x8] sm:$0xff]
    %v23 = vmul.f32 %v21, %v21
    %v24 = vmul.f32 %v22, %v22
    %25 = vadd.xlane.f32.xlu0 %v23
    %v26 = vpop.xlane.xlu0 %25
    %27 = vadd.xlane.f32.xlu0 %v24
    %v28 = vpop.xlane.xlu0 %27
    %v29 = vrcp.pop 128.0
    %v30 = vmul.f32 %v26, %v29
    %v31 = vmul.f32 %v28, %v29
    %v32 = vadd.f32 %v30, 1e-05
    %v33 = vadd.f32 %v31, 1e-05
    %v34 = vrsqrt.pop %v32
    %v35 = vrsqrt.pop %v33
    %v36 = vmul.f32 %v21, %v34
    %v37 = vmul.f32 %v22, %v35
    %v38 = vld [vmem:[%s1] sm:$0x1]
    %v40 = vlaneseq
    %v41 = vshrl.u32 %v40, 7
    %v42 = vsub.s32 0, %v41
    %v43 = vrot.slane %v38, %v42
    %v45 = vmul.f32 %v36, %v43
    %v46 = vmul.f32 %v37, %v43
    %v47 = vld [vmem:[%s2] sm:$0xff]
    %v48 = vld [vmem:[%s2 + $0x8] sm:$0xff]
    %v49 = vld [vmem:[%s2 + $0x10] sm:$0xff]
    %v50 = vld [vmem:[%s2 + $0x18] sm:$0xff]
    %v51 = vld [vmem:[%s2 + $0x20] sm:$0xff]
    %v52 = vld [vmem:[%s2 + $0x28] sm:$0xff]
    %v53 = vld [vmem:[%s2 + $0x30] sm:$0xff]
    %v54 = vld [vmem:[%s2 + $0x38] sm:$0xff]
    %v55 = vld [vmem:[%s2 + $0x40] sm:$0xff]
    %v56 = vld [vmem:[%s2 + $0x48] sm:$0xff]
    %v57 = vld [vmem:[%s2 + $0x50] sm:$0xff]
    %v58 = vld [vmem:[%s2 + $0x58] sm:$0xff]
    %v59 = vld [vmem:[%s2 + $0x60] sm:$0xff]
    %v60 = vld [vmem:[%s2 + $0x68] sm:$0xff]
    %v61 = vld [vmem:[%s2 + $0x70] sm:$0xff]
    %v62 = vld [vmem:[%s2 + $0x78] sm:$0xff]
    %v63 = vld [vmem:[%s2 + $0x80] sm:$0xff]
    %v64 = vld [vmem:[%s2 + $0x88] sm:$0xff]
    %v65 = vld [vmem:[%s2 + $0x90] sm:$0xff]
    %v66 = vld [vmem:[%s2 + $0x98] sm:$0xff]
    %v67 = vld [vmem:[%s2 + $0xa0] sm:$0xff]
    %v68 = vld [vmem:[%s2 + $0xa8] sm:$0xff]
    %v69 = vld [vmem:[%s2 + $0xb0] sm:$0xff]
    %v70 = vld [vmem:[%s2 + $0xb8] sm:$0xff]
    %v71 = vld [vmem:[%s2 + $0xc0] sm:$0xff]
    %v72 = vld [vmem:[%s2 + $0xc8] sm:$0xff]
    %v73 = vld [vmem:[%s2 + $0xd0] sm:$0xff]
    %v74 = vld [vmem:[%s2 + $0xd8] sm:$0xff]
    %v75 = vld [vmem:[%s2 + $0xe0] sm:$0xff]
    %v76 = vld [vmem:[%s2 + $0xe8] sm:$0xff]
    %v77 = vld [vmem:[%s2 + $0xf0] sm:$0xff]
    %v78 = vld [vmem:[%s2 + $0xf8] sm:$0xff]
    %v79 = vld [vmem:[%s2 + $0x100] sm:$0xff]
    %v80 = vld [vmem:[%s2 + $0x108] sm:$0xff]
    %v81 = vld [vmem:[%s2 + $0x110] sm:$0xff]
    %v82 = vld [vmem:[%s2 + $0x118] sm:$0xff]
    %v83 = vld [vmem:[%s2 + $0x120] sm:$0xff]
    %v84 = vld [vmem:[%s2 + $0x128] sm:$0xff]
    %v85 = vld [vmem:[%s2 + $0x130] sm:$0xff]
    %v86 = vld [vmem:[%s2 + $0x138] sm:$0xff]
    %v87 = vld [vmem:[%s2 + $0x140] sm:$0xff]
    %v88 = vld [vmem:[%s2 + $0x148] sm:$0xff]
    %v89 = vld [vmem:[%s2 + $0x150] sm:$0xff]
    %v90 = vld [vmem:[%s2 + $0x158] sm:$0xff]
    %v91 = vld [vmem:[%s2 + $0x160] sm:$0xff]
    %v92 = vld [vmem:[%s2 + $0x168] sm:$0xff]
    %v93 = vld [vmem:[%s2 + $0x170] sm:$0xff]
    %v94 = vld [vmem:[%s2 + $0x178] sm:$0xff]
    %v95 = vld [vmem:[%s2 + $0x180] sm:$0xff]
    %v96 = vld [vmem:[%s2 + $0x188] sm:$0xff]
    %v97 = vld [vmem:[%s2 + $0x190] sm:$0xff]
    %v98 = vld [vmem:[%s2 + $0x198] sm:$0xff]
    %v99 = vld [vmem:[%s2 + $0x1a0] sm:$0xff]
    %v100 = vld [vmem:[%s2 + $0x1a8] sm:$0xff]
    %v101 = vld [vmem:[%s2 + $0x1b0] sm:$0xff]
    %v102 = vld [vmem:[%s2 + $0x1b8] sm:$0xff]
    %v103 = vld [vmem:[%s2 + $0x1c0] sm:$0xff]
    %v104 = vld [vmem:[%s2 + $0x1c8] sm:$0xff]
    %v105 = vld [vmem:[%s2 + $0x1d0] sm:$0xff]
    %v106 = vld [vmem:[%s2 + $0x1d8] sm:$0xff]
    %v107 = vld [vmem:[%s2 + $0x1e0] sm:$0xff]
    %v108 = vld [vmem:[%s2 + $0x1e8] sm:$0xff]
    %v109 = vld [vmem:[%s2 + $0x1f0] sm:$0xff]
    %v110 = vld [vmem:[%s2 + $0x1f8] sm:$0xff]
    %111 = vmatprep.subr.mxu0 %v108
    %112 = vmatpush1.msra.mxu0 %v107
    %113 = vmatprep.subr.mxu0 %v104
    %114 = vmatpush1.msra.mxu0 %v103
    %115 = vmatprep.subr.mxu0 %v100
    %116 = vmatpush1.msra.mxu0 %v99
    %117 = vmatprep.subr.mxu0 %v96
    %118 = vmatpush1.msra.mxu0 %v95
    %119 = vmatprep.subr.mxu0 %v92
    %120 = vmatpush1.msra.mxu0 %v91
    %121 = vmatprep.subr.mxu0 %v88
    %122 = vmatpush1.msra.mxu0 %v87
    %123 = vmatprep.subr.mxu0 %v84
    %124 = vmatpush1.msra.mxu0 %v83
    %125 = vmatprep.subr.mxu0 %v80
    %126 = vmatpush1.msra.mxu0 %v79
    %127 = vmatprep.subr.mxu0 %v76
    %128 = vmatpush1.msra.mxu0 %v75
    %129 = vmatprep.subr.mxu0 %v72
    %130 = vmatpush1.msra.mxu0 %v71
    %131 = vmatprep.subr.mxu0 %v68
    %132 = vmatpush1.msra.mxu0 %v67
    %133 = vmatprep.subr.mxu0 %v64
    %134 = vmatpush1.msra.mxu0 %v63
    %135 = vmatprep.subr.mxu0 %v60
    %136 = vmatpush1.msra.mxu0 %v59
    %137 = vmatprep.subr.mxu0 %v56
    %138 = vmatpush1.msra.mxu0 %v55
    %139 = vmatprep.subr.mxu0 %v52
    %140 = vmatpush1.msra.mxu0 %v51
    %141 = vmatprep.subr.mxu0 %v48
    %142 = vmatpush1.msra.mxu0 %v47
    %143 = vmatprep.subr.mxu0 0.0
    %144 = vmatpush2.msra.mxu0 0.0
    %145 = vmatprep.subr.mxu0 0.0
    %146 = vmatpush2.msra.mxu0 0.0
    %147 = vmatprep.subr.mxu0 0.0
    %148 = vmatpush2.msra.mxu0 0.0
    %149 = vmatprep.subr.mxu0 0.0
    %150 = vmatpush2.msra.mxu0 0.0
    %151 = vmatprep.subr.mxu0 0.0
    %152 = vmatpush2.msra.mxu0 0.0
    %153 = vmatprep.subr.mxu0 0.0
    %154 = vmatpush2.msra.mxu0 0.0
    %155 = vmatprep.subr.mxu0 0.0
    %156 = vmatpush2.msra.mxu0 0.0
    %157 = vmatprep.subr.mxu0 0.0
    %158 = vmatpush2.msra.mxu0 0.0
    %159 = vmatprep.subr.mxu0 0.0
    %160 = vmatpush2.msra.mxu0 0.0
    %161 = vmatprep.subr.mxu0 0.0
    %162 = vmatpush2.msra.mxu0 0.0
    %163 = vmatprep.subr.mxu0 0.0
    %164 = vmatpush2.msra.mxu0 0.0
    %165 = vmatprep.subr.mxu0 0.0
    %166 = vmatpush2.msra.mxu0 0.0
    %167 = vmatprep.subr.mxu0 0.0
    %168 = vmatpush2.msra.mxu0 0.0
    %169 = vmatprep.subr.mxu0 0.0
    %170 = vmatpush2.msra.mxu0 0.0
    %171 = vmatprep.subr.mxu0 0.0
    %172 = vmatpush2.msra.mxu0 0.0
    %173 = vmatprep.subr.mxu0 0.0
    %174 = vmatpush2.msra.mxu0 0.0
    %175 = vmatprep.mubr.f32.mxu0 0.0
    %176 = vmatmul.mubr.f32.gmra.mxu0 %v45
    %v177 = vpop.f32.mrf.mxu0
    %v178 = vadd.f32 0.0, %v177
    %v179 = vpop.f32.mrf.mxu0
    %v180 = vadd.f32 0.0, %v179
    %181 = vmatprep.mubr.f32.mxu0 0.0
    %182 = vmatmul.mubr.f32.gmra.mxu0 %v46
    %v183 = vpop.f32.mrf.mxu0
    %v184 = vadd.f32 0.0, %v183
    %v185 = vpop.f32.mrf.mxu0
    %v186 = vadd.f32 0.0, %v185
    %187 = vdwg.mxu0
    %188 = vmatprep.subr.mxu0 %v110
    %189 = vmatpush1.msra.mxu0 %v109
    %190 = vmatprep.subr.mxu0 %v106
    %191 = vmatpush1.msra.mxu0 %v105
    %192 = vmatprep.subr.mxu0 %v102
    %193 = vmatpush1.msra.mxu0 %v101
    %194 = vmatprep.subr.mxu0 %v98
    %195 = vmatpush1.msra.mxu0 %v97
    %196 = vmatprep.subr.mxu0 %v94
    %197 = vmatpush1.msra.mxu0 %v93
    %198 = vmatprep.subr.mxu0 %v90
    %199 = vmatpush1.msra.mxu0 %v89
    %200 = vmatprep.subr.mxu0 %v86
    %201 = vmatpush1.msra.mxu0 %v85
    %202 = vmatprep.subr.mxu0 %v82
    %203 = vmatpush1.msra.mxu0 %v81
    %204 = vmatprep.subr.mxu0 %v78
    %205 = vmatpush1.msra.mxu0 %v77
    %206 = vmatprep.subr.mxu0 %v74
    %207 = vmatpush1.msra.mxu0 %v73
    %208 = vmatprep.subr.mxu0 %v70
    %209 = vmatpush1.msra.mxu0 %v69
    %210 = vmatprep.subr.mxu0 %v66
    %211 = vmatpush1.msra.mxu0 %v65
    %212 = vmatprep.subr.mxu0 %v62
    %213 = vmatpush1.msra.mxu0 %v61
    %214 = vmatprep.subr.mxu0 %v58
    %215 = vmatpush1.msra.mxu0 %v57
    %216 = vmatprep.subr.mxu0 %v54
    %217 = vmatpush1.msra.mxu0 %v53
    %218 = vmatprep.subr.mxu0 %v50
    %219 = vmatpush1.msra.mxu0 %v49
    %220 = vmatprep.subr.mxu0 0.0
    %221 = vmatpush2.msra.mxu0 0.0
    %222 = vmatprep.subr.mxu0 0.0
    %223 = vmatpush2.msra.mxu0 0.0
    %224 = vmatprep.subr.mxu0 0.0
    %225 = vmatpush2.msra.mxu0 0.0
    %226 = vmatprep.subr.mxu0 0.0
    %227 = vmatpush2.msra.mxu0 0.0
    %228 = vmatprep.subr.mxu0 0.0
    %229 = vmatpush2.msra.mxu0 0.0
    %230 = vmatprep.subr.mxu0 0.0
    %231 = vmatpush2.msra.mxu0 0.0
    %232 = vmatprep.subr.mxu0 0.0
    %233 = vmatpush2.msra.mxu0 0.0
    %234 = vmatprep.subr.mxu0 0.0
    %235 = vmatpush2.msra.mxu0 0.0
    %236 = vmatprep.subr.mxu0 0.0
    %237 = vmatpush2.msra.mxu0 0.0
    %238 = vmatprep.subr.mxu0 0.0
    %239 = vmatpush2.msra.mxu0 0.0
    %240 = vmatprep.subr.mxu0 0.0
    %241 = vmatpush2.msra.mxu0 0.0
    %242 = vmatprep.subr.mxu0 0.0
    %243 = vmatpush2.msra.mxu0 0.0
    %244 = vmatprep.subr.mxu0 0.0
    %245 = vmatpush2.msra.mxu0 0.0
    %246 = vmatprep.subr.mxu0 0.0
    %247 = vmatpush2.msra.mxu0 0.0
    %248 = vmatprep.subr.mxu0 0.0
    %249 = vmatpush2.msra.mxu0 0.0
    %250 = vmatprep.subr.mxu0 0.0
    %251 = vmatpush2.msra.mxu0 0.0
    %252 = vmatprep.mubr.f32.mxu0 0.0
    %253 = vmatmul.mubr.f32.gmra.mxu0 %v45
    %v254 = vpop.f32.mrf.mxu0
    %v255 = vadd.f32 0.0, %v254
    %v256 = vpop.f32.mrf.mxu0
    %v257 = vadd.f32 0.0, %v256
    %258 = vmatprep.mubr.f32.mxu0 0.0
    %259 = vmatmul.mubr.f32.gmra.mxu0 %v46
    %v260 = vpop.f32.mrf.mxu0
    %v261 = vadd.f32 0.0, %v260
    %v262 = vpop.f32.mrf.mxu0
    %v263 = vadd.f32 0.0, %v262
    %264 = vdwg.mxu0
    %v265 = vld [vmem:[%s3] sm:$0xff]
    %v266 = vld [vmem:[%s3 + $0x8] sm:$0xff]
    %v267 = vld [vmem:[%s3 + $0x10] sm:$0xff]
    %v268 = vld [vmem:[%s3 + $0x18] sm:$0xff]
    %v269 = vld [vmem:[%s3 + $0x20] sm:$0xff]
    %v270 = vld [vmem:[%s3 + $0x28] sm:$0xff]
    %v271 = vld [vmem:[%s3 + $0x30] sm:$0xff]
    %v272 = vld [vmem:[%s3 + $0x38] sm:$0xff]
    %v273 = vld [vmem:[%s3 + $0x40] sm:$0xff]
    %v274 = vld [vmem:[%s3 + $0x48] sm:$0xff]
    %v275 = vld [vmem:[%s3 + $0x50] sm:$0xff]
    %v276 = vld [vmem:[%s3 + $0x58] sm:$0xff]
    %v277 = vld [vmem:[%s3 + $0x60] sm:$0xff]
    %v278 = vld [vmem:[%s3 + $0x68] sm:$0xff]
    %v279 = vld [vmem:[%s3 + $0x70] sm:$0xff]
    %v280 = vld [vmem:[%s3 + $0x78] sm:$0xff]
    %v281 = vld [vmem:[%s3 + $0x80] sm:$0xff]
    %v282 = vld [vmem:[%s3 + $0x88] sm:$0xff]
    %v283 = vld [vmem:[%s3 + $0x90] sm:$0xff]
    %v284 = vld [vmem:[%s3 + $0x98] sm:$0xff]
    %v285 = vld [vmem:[%s3 + $0xa0] sm:$0xff]
    %v286 = vld [vmem:[%s3 + $0xa8] sm:$0xff]
    %v287 = vld [vmem:[%s3 + $0xb0] sm:$0xff]
    %v288 = vld [vmem:[%s3 + $0xb8] sm:$0xff]
    %v289 = vld [vmem:[%s3 + $0xc0] sm:$0xff]
    %v290 = vld [vmem:[%s3 + $0xc8] sm:$0xff]
    %v291 = vld [vmem:[%s3 + $0xd0] sm:$0xff]
    %v292 = vld [vmem:[%s3 + $0xd8] sm:$0xff]
    %v293 = vld [vmem:[%s3 + $0xe0] sm:$0xff]
    %v294 = vld [vmem:[%s3 + $0xe8] sm:$0xff]
    %v295 = vld [vmem:[%s3 + $0xf0] sm:$0xff]
    %v296 = vld [vmem:[%s3 + $0xf8] sm:$0xff]
    %v297 = vld [vmem:[%s3 + $0x100] sm:$0xff]
    %v298 = vld [vmem:[%s3 + $0x108] sm:$0xff]
    %v299 = vld [vmem:[%s3 + $0x110] sm:$0xff]
    %v300 = vld [vmem:[%s3 + $0x118] sm:$0xff]
    %v301 = vld [vmem:[%s3 + $0x120] sm:$0xff]
    %v302 = vld [vmem:[%s3 + $0x128] sm:$0xff]
    %v303 = vld [vmem:[%s3 + $0x130] sm:$0xff]
    %v304 = vld [vmem:[%s3 + $0x138] sm:$0xff]
    %v305 = vld [vmem:[%s3 + $0x140] sm:$0xff]
    %v306 = vld [vmem:[%s3 + $0x148] sm:$0xff]
    %v307 = vld [vmem:[%s3 + $0x150] sm:$0xff]
    %v308 = vld [vmem:[%s3 + $0x158] sm:$0xff]
    %v309 = vld [vmem:[%s3 + $0x160] sm:$0xff]
    %v310 = vld [vmem:[%s3 + $0x168] sm:$0xff]
    %v311 = vld [vmem:[%s3 + $0x170] sm:$0xff]
    %v312 = vld [vmem:[%s3 + $0x178] sm:$0xff]
    %v313 = vld [vmem:[%s3 + $0x180] sm:$0xff]
    %v314 = vld [vmem:[%s3 + $0x188] sm:$0xff]
    %v315 = vld [vmem:[%s3 + $0x190] sm:$0xff]
    %v316 = vld [vmem:[%s3 + $0x198] sm:$0xff]
    %v317 = vld [vmem:[%s3 + $0x1a0] sm:$0xff]
    %v318 = vld [vmem:[%s3 + $0x1a8] sm:$0xff]
    %v319 = vld [vmem:[%s3 + $0x1b0] sm:$0xff]
    %v320 = vld [vmem:[%s3 + $0x1b8] sm:$0xff]
    %v321 = vld [vmem:[%s3 + $0x1c0] sm:$0xff]
    %v322 = vld [vmem:[%s3 + $0x1c8] sm:$0xff]
    %v323 = vld [vmem:[%s3 + $0x1d0] sm:$0xff]
    %v324 = vld [vmem:[%s3 + $0x1d8] sm:$0xff]
    %v325 = vld [vmem:[%s3 + $0x1e0] sm:$0xff]
    %v326 = vld [vmem:[%s3 + $0x1e8] sm:$0xff]
    %v327 = vld [vmem:[%s3 + $0x1f0] sm:$0xff]
    %v328 = vld [vmem:[%s3 + $0x1f8] sm:$0xff]
    %329 = vmatprep.subr.mxu0 %v326
    %330 = vmatpush1.msra.mxu0 %v325
    %331 = vmatprep.subr.mxu0 %v322
    %332 = vmatpush1.msra.mxu0 %v321
    %333 = vmatprep.subr.mxu0 %v318
    %334 = vmatpush1.msra.mxu0 %v317
    %335 = vmatprep.subr.mxu0 %v314
    %336 = vmatpush1.msra.mxu0 %v313
    %337 = vmatprep.subr.mxu0 %v310
    %338 = vmatpush1.msra.mxu0 %v309
    %339 = vmatprep.subr.mxu0 %v306
    %340 = vmatpush1.msra.mxu0 %v305
    %341 = vmatprep.subr.mxu0 %v302
    %342 = vmatpush1.msra.mxu0 %v301
    %343 = vmatprep.subr.mxu0 %v298
    %344 = vmatpush1.msra.mxu0 %v297
    %345 = vmatprep.subr.mxu0 %v294
    %346 = vmatpush1.msra.mxu0 %v293
    %347 = vmatprep.subr.mxu0 %v290
    %348 = vmatpush1.msra.mxu0 %v289
    %349 = vmatprep.subr.mxu0 %v286
    %350 = vmatpush1.msra.mxu0 %v285
    %351 = vmatprep.subr.mxu0 %v282
    %352 = vmatpush1.msra.mxu0 %v281
    %353 = vmatprep.subr.mxu0 %v278
    %354 = vmatpush1.msra.mxu0 %v277
    %355 = vmatprep.subr.mxu0 %v274
    %356 = vmatpush1.msra.mxu0 %v273
    %357 = vmatprep.subr.mxu0 %v270
    %358 = vmatpush1.msra.mxu0 %v269
    %359 = vmatprep.subr.mxu0 %v266
    %360 = vmatpush1.msra.mxu0 %v265
    %361 = vmatprep.subr.mxu0 0.0
    %362 = vmatpush2.msra.mxu0 0.0
    %363 = vmatprep.subr.mxu0 0.0
    %364 = vmatpush2.msra.mxu0 0.0
    %365 = vmatprep.subr.mxu0 0.0
    %366 = vmatpush2.msra.mxu0 0.0
    %367 = vmatprep.subr.mxu0 0.0
    %368 = vmatpush2.msra.mxu0 0.0
    %369 = vmatprep.subr.mxu0 0.0
    %370 = vmatpush2.msra.mxu0 0.0
    %371 = vmatprep.subr.mxu0 0.0
    %372 = vmatpush2.msra.mxu0 0.0
    %373 = vmatprep.subr.mxu0 0.0
    %374 = vmatpush2.msra.mxu0 0.0
    %375 = vmatprep.subr.mxu0 0.0
    %376 = vmatpush2.msra.mxu0 0.0
    %377 = vmatprep.subr.mxu0 0.0
    %378 = vmatpush2.msra.mxu0 0.0
    %379 = vmatprep.subr.mxu0 0.0
    %380 = vmatpush2.msra.mxu0 0.0
    %381 = vmatprep.subr.mxu0 0.0
    %382 = vmatpush2.msra.mxu0 0.0
    %383 = vmatprep.subr.mxu0 0.0
    %384 = vmatpush2.msra.mxu0 0.0
    %385 = vmatprep.subr.mxu0 0.0
    %386 = vmatpush2.msra.mxu0 0.0
    %387 = vmatprep.subr.mxu0 0.0
    %388 = vmatpush2.msra.mxu0 0.0
    %389 = vmatprep.subr.mxu0 0.0
    %390 = vmatpush2.msra.mxu0 0.0
    %391 = vmatprep.subr.mxu0 0.0
    %392 = vmatpush2.msra.mxu0 0.0
    %393 = vmatprep.mubr.f32.mxu0 0.0
    %394 = vmatmul.mubr.f32.gmra.mxu0 %v45
    %v395 = vpop.f32.mrf.mxu0
    %v396 = vadd.f32 0.0, %v395
    %v397 = vpop.f32.mrf.mxu0
    %v398 = vadd.f32 0.0, %v397
    %399 = vmatprep.mubr.f32.mxu0 0.0
    %400 = vmatmul.mubr.f32.gmra.mxu0 %v46
    %v401 = vpop.f32.mrf.mxu0
    %v402 = vadd.f32 0.0, %v401
    %v403 = vpop.f32.mrf.mxu0
    %v404 = vadd.f32 0.0, %v403
    %405 = vdwg.mxu0
    %406 = vmatprep.subr.mxu0 %v328
    %407 = vmatpush1.msra.mxu0 %v327
    %408 = vmatprep.subr.mxu0 %v324
    %409 = vmatpush1.msra.mxu0 %v323
    %410 = vmatprep.subr.mxu0 %v320
    %411 = vmatpush1.msra.mxu0 %v319
    %412 = vmatprep.subr.mxu0 %v316
    %413 = vmatpush1.msra.mxu0 %v315
    %414 = vmatprep.subr.mxu0 %v312
    %415 = vmatpush1.msra.mxu0 %v311
    %416 = vmatprep.subr.mxu0 %v308
    %417 = vmatpush1.msra.mxu0 %v307
    %418 = vmatprep.subr.mxu0 %v304
    %419 = vmatpush1.msra.mxu0 %v303
    %420 = vmatprep.subr.mxu0 %v300
    %421 = vmatpush1.msra.mxu0 %v299
    %422 = vmatprep.subr.mxu0 %v296
    %423 = vmatpush1.msra.mxu0 %v295
    %424 = vmatprep.subr.mxu0 %v292
    %425 = vmatpush1.msra.mxu0 %v291
    %426 = vmatprep.subr.mxu0 %v288
    %427 = vmatpush1.msra.mxu0 %v287
    %428 = vmatprep.subr.mxu0 %v284
    %429 = vmatpush1.msra.mxu0 %v283
    %430 = vmatprep.subr.mxu0 %v280
    %431 = vmatpush1.msra.mxu0 %v279
    %432 = vmatprep.subr.mxu0 %v276
    %433 = vmatpush1.msra.mxu0 %v275
    %434 = vmatprep.subr.mxu0 %v272
    %435 = vmatpush1.msra.mxu0 %v271
    %436 = vmatprep.subr.mxu0 %v268
    %437 = vmatpush1.msra.mxu0 %v267
    %438 = vmatprep.subr.mxu0 0.0
    %439 = vmatpush2.msra.mxu0 0.0
    %440 = vmatprep.subr.mxu0 0.0
    %441 = vmatpush2.msra.mxu0 0.0
    %442 = vmatprep.subr.mxu0 0.0
    %443 = vmatpush2.msra.mxu0 0.0
    %444 = vmatprep.subr.mxu0 0.0
    %445 = vmatpush2.msra.mxu0 0.0
    %446 = vmatprep.subr.mxu0 0.0
    %447 = vmatpush2.msra.mxu0 0.0
    %448 = vmatprep.subr.mxu0 0.0
    %449 = vmatpush2.msra.mxu0 0.0
    %450 = vmatprep.subr.mxu0 0.0
    %451 = vmatpush2.msra.mxu0 0.0
    %452 = vmatprep.subr.mxu0 0.0
    %453 = vmatpush2.msra.mxu0 0.0
    %454 = vmatprep.subr.mxu0 0.0
    %455 = vmatpush2.msra.mxu0 0.0
    %456 = vmatprep.subr.mxu0 0.0
    %457 = vmatpush2.msra.mxu0 0.0
    %458 = vmatprep.subr.mxu0 0.0
    %459 = vmatpush2.msra.mxu0 0.0
    %460 = vmatprep.subr.mxu0 0.0
    %461 = vmatpush2.msra.mxu0 0.0
    %462 = vmatprep.subr.mxu0 0.0
    %463 = vmatpush2.msra.mxu0 0.0
    %464 = vmatprep.subr.mxu0 0.0
    %465 = vmatpush2.msra.mxu0 0.0
    %466 = vmatprep.subr.mxu0 0.0
    %467 = vmatpush2.msra.mxu0 0.0
    %468 = vmatprep.subr.mxu0 0.0
    %469 = vmatpush2.msra.mxu0 0.0
    %470 = vmatprep.mubr.f32.mxu0 0.0
    %471 = vmatmul.mubr.f32.gmra.mxu0 %v45
    %v472 = vpop.f32.mrf.mxu0
    %v473 = vadd.f32 0.0, %v472
    %v474 = vpop.f32.mrf.mxu0
    %v475 = vadd.f32 0.0, %v474
    %476 = vmatprep.mubr.f32.mxu0 0.0
    %477 = vmatmul.mubr.f32.gmra.mxu0 %v46
    %v478 = vpop.f32.mrf.mxu0
    %v479 = vadd.f32 0.0, %v478
    %v480 = vpop.f32.mrf.mxu0
    %v481 = vadd.f32 0.0, %v480
    %482 = vdwg.mxu0
    %v483 = vxor.u32 %v178, 2147483648
    %v484 = vxor.u32 %v180, 2147483648
    %v485 = vxor.u32 %v255, 2147483648
    %v486 = vxor.u32 %v257, 2147483648
    %v487 = vxor.u32 %v184, 2147483648
    %v488 = vxor.u32 %v186, 2147483648
    %v489 = vxor.u32 %v261, 2147483648
    %v490 = vxor.u32 %v263, 2147483648
    %v491 = vmul.f32 %v483, 1.442695
    %v492 = vpow.pop %v491
    %v493 = vmul.f32 %v484, 1.442695
    %v494 = vpow.pop %v493
    %v495 = vmul.f32 %v485, 1.442695
    %v496 = vpow.pop %v495
    %v497 = vmul.f32 %v486, 1.442695
    %v498 = vpow.pop %v497
    %v499 = vmul.f32 %v487, 1.442695
    %v500 = vpow.pop %v499
    %v501 = vmul.f32 %v488, 1.442695
    %v502 = vpow.pop %v501
    %v503 = vmul.f32 %v489, 1.442695
    %v504 = vpow.pop %v503
    %v505 = vmul.f32 %v490, 1.442695
    %v506 = vpow.pop %v505
    %v507 = vadd.f32 %v492, 1.0
    %v508 = vadd.f32 %v494, 1.0
    %v509 = vadd.f32 %v496, 1.0
    %v510 = vadd.f32 %v498, 1.0
    %v511 = vadd.f32 %v500, 1.0
    %v512 = vadd.f32 %v502, 1.0
    %v513 = vadd.f32 %v504, 1.0
    %v514 = vadd.f32 %v506, 1.0
    %v515 = vrcp.pop %v507
    %v516 = vmul.f32 1.0, %v515
    %v517 = vrcp.pop %v508
    %v518 = vmul.f32 1.0, %v517
    %v519 = vrcp.pop %v509
    %v520 = vmul.f32 1.0, %v519
    %v521 = vrcp.pop %v510
    %v522 = vmul.f32 1.0, %v521
    %v523 = vrcp.pop %v511
    %v524 = vmul.f32 1.0, %v523
    %v525 = vrcp.pop %v512
    %v526 = vmul.f32 1.0, %v525
    %v527 = vrcp.pop %v513
    %v528 = vmul.f32 1.0, %v527
    %v529 = vrcp.pop %v514
    %v530 = vmul.f32 1.0, %v529
    %v531 = vmul.f32 %v178, %v516
    %v532 = vmul.f32 %v180, %v518
    %v533 = vmul.f32 %v255, %v520
    %v534 = vmul.f32 %v257, %v522
    %v535 = vmul.f32 %v184, %v524
    %v536 = vmul.f32 %v186, %v526
    %v537 = vmul.f32 %v261, %v528
    %v538 = vmul.f32 %v263, %v530
    %v539 = vmul.f32 %v531, %v396
    %v540 = vmul.f32 %v532, %v398
    %v541 = vmul.f32 %v533, %v473
    %v542 = vmul.f32 %v534, %v475
    %v543 = vmul.f32 %v535, %v402
    %v544 = vmul.f32 %v536, %v404
    %v545 = vmul.f32 %v537, %v479
    %v546 = vmul.f32 %v538, %v481
    %v547 = vld [vmem:[%s4] sm:$0xff]
    %v548 = vld [vmem:[%s4 + $0x8] sm:$0xff]
    %v549 = vld [vmem:[%s4 + $0x10] sm:$0xff]
    %v550 = vld [vmem:[%s4 + $0x18] sm:$0xff]
    %v551 = vld [vmem:[%s4 + $0x20] sm:$0xff]
    %v552 = vld [vmem:[%s4 + $0x28] sm:$0xff]
    %v553 = vld [vmem:[%s4 + $0x30] sm:$0xff]
    %v554 = vld [vmem:[%s4 + $0x38] sm:$0xff]
    %v555 = vld [vmem:[%s4 + $0x40] sm:$0xff]
    %v556 = vld [vmem:[%s4 + $0x48] sm:$0xff]
    %v557 = vld [vmem:[%s4 + $0x50] sm:$0xff]
    %v558 = vld [vmem:[%s4 + $0x58] sm:$0xff]
    %v559 = vld [vmem:[%s4 + $0x60] sm:$0xff]
    %v560 = vld [vmem:[%s4 + $0x68] sm:$0xff]
    %v561 = vld [vmem:[%s4 + $0x70] sm:$0xff]
    %v562 = vld [vmem:[%s4 + $0x78] sm:$0xff]
    %v563 = vld [vmem:[%s4 + $0x80] sm:$0xff]
    %v564 = vld [vmem:[%s4 + $0x88] sm:$0xff]
    %v565 = vld [vmem:[%s4 + $0x90] sm:$0xff]
    %v566 = vld [vmem:[%s4 + $0x98] sm:$0xff]
    %v567 = vld [vmem:[%s4 + $0xa0] sm:$0xff]
    %v568 = vld [vmem:[%s4 + $0xa8] sm:$0xff]
    %v569 = vld [vmem:[%s4 + $0xb0] sm:$0xff]
    %v570 = vld [vmem:[%s4 + $0xb8] sm:$0xff]
    %v571 = vld [vmem:[%s4 + $0xc0] sm:$0xff]
    %v572 = vld [vmem:[%s4 + $0xc8] sm:$0xff]
    %v573 = vld [vmem:[%s4 + $0xd0] sm:$0xff]
    %v574 = vld [vmem:[%s4 + $0xd8] sm:$0xff]
    %v575 = vld [vmem:[%s4 + $0xe0] sm:$0xff]
    %v576 = vld [vmem:[%s4 + $0xe8] sm:$0xff]
    %v577 = vld [vmem:[%s4 + $0xf0] sm:$0xff]
    %v578 = vld [vmem:[%s4 + $0xf8] sm:$0xff]
    %v579 = vld [vmem:[%s4 + $0x100] sm:$0xff]
    %v580 = vld [vmem:[%s4 + $0x108] sm:$0xff]
    %v581 = vld [vmem:[%s4 + $0x110] sm:$0xff]
    %v582 = vld [vmem:[%s4 + $0x118] sm:$0xff]
    %v583 = vld [vmem:[%s4 + $0x120] sm:$0xff]
    %v584 = vld [vmem:[%s4 + $0x128] sm:$0xff]
    %v585 = vld [vmem:[%s4 + $0x130] sm:$0xff]
    %v586 = vld [vmem:[%s4 + $0x138] sm:$0xff]
    %v587 = vld [vmem:[%s4 + $0x140] sm:$0xff]
    %v588 = vld [vmem:[%s4 + $0x148] sm:$0xff]
    %v589 = vld [vmem:[%s4 + $0x150] sm:$0xff]
    %v590 = vld [vmem:[%s4 + $0x158] sm:$0xff]
    %v591 = vld [vmem:[%s4 + $0x160] sm:$0xff]
    %v592 = vld [vmem:[%s4 + $0x168] sm:$0xff]
    %v593 = vld [vmem:[%s4 + $0x170] sm:$0xff]
    %v594 = vld [vmem:[%s4 + $0x178] sm:$0xff]
    %v595 = vld [vmem:[%s4 + $0x180] sm:$0xff]
    %v596 = vld [vmem:[%s4 + $0x188] sm:$0xff]
    %v597 = vld [vmem:[%s4 + $0x190] sm:$0xff]
    %v598 = vld [vmem:[%s4 + $0x198] sm:$0xff]
    %v599 = vld [vmem:[%s4 + $0x1a0] sm:$0xff]
    %v600 = vld [vmem:[%s4 + $0x1a8] sm:$0xff]
    %v601 = vld [vmem:[%s4 + $0x1b0] sm:$0xff]
    %v602 = vld [vmem:[%s4 + $0x1b8] sm:$0xff]
    %v603 = vld [vmem:[%s4 + $0x1c0] sm:$0xff]
    %v604 = vld [vmem:[%s4 + $0x1c8] sm:$0xff]
    %v605 = vld [vmem:[%s4 + $0x1d0] sm:$0xff]
    %v606 = vld [vmem:[%s4 + $0x1d8] sm:$0xff]
    %v607 = vld [vmem:[%s4 + $0x1e0] sm:$0xff]
    %v608 = vld [vmem:[%s4 + $0x1e8] sm:$0xff]
    %v609 = vld [vmem:[%s4 + $0x1f0] sm:$0xff]
    %v610 = vld [vmem:[%s4 + $0x1f8] sm:$0xff]
    %611 = vmatprep.subr.mxu0 0.0
    %612 = vmatpush1.msra.mxu0 %v562
    %613 = vmatprep.subr.mxu0 0.0
    %614 = vmatpush1.msra.mxu0 %v561
    %615 = vmatprep.subr.mxu0 0.0
    %616 = vmatpush1.msra.mxu0 %v560
    %617 = vmatprep.subr.mxu0 0.0
    %618 = vmatpush1.msra.mxu0 %v559
    %619 = vmatprep.subr.mxu0 0.0
    %620 = vmatpush1.msra.mxu0 %v558
    %621 = vmatprep.subr.mxu0 0.0
    %622 = vmatpush1.msra.mxu0 %v557
    %623 = vmatprep.subr.mxu0 0.0
    %624 = vmatpush1.msra.mxu0 %v556
    %625 = vmatprep.subr.mxu0 0.0
    %626 = vmatpush1.msra.mxu0 %v555
    %627 = vmatprep.subr.mxu0 0.0
    %628 = vmatpush1.msra.mxu0 %v554
    %629 = vmatprep.subr.mxu0 0.0
    %630 = vmatpush1.msra.mxu0 %v553
    %631 = vmatprep.subr.mxu0 0.0
    %632 = vmatpush1.msra.mxu0 %v552
    %633 = vmatprep.subr.mxu0 0.0
    %634 = vmatpush1.msra.mxu0 %v551
    %635 = vmatprep.subr.mxu0 0.0
    %636 = vmatpush1.msra.mxu0 %v550
    %637 = vmatprep.subr.mxu0 0.0
    %638 = vmatpush1.msra.mxu0 %v549
    %639 = vmatprep.subr.mxu0 0.0
    %640 = vmatpush1.msra.mxu0 %v548
    %641 = vmatprep.subr.mxu0 0.0
    %642 = vmatpush1.msra.mxu0 %v547
    %643 = vmatprep.subr.mxu0 0.0
    %644 = vmatpush2.msra.mxu0 %v578
    %645 = vmatprep.subr.mxu0 0.0
    %646 = vmatpush2.msra.mxu0 %v577
    %647 = vmatprep.subr.mxu0 0.0
    %648 = vmatpush2.msra.mxu0 %v576
    %649 = vmatprep.subr.mxu0 0.0
    %650 = vmatpush2.msra.mxu0 %v575
    %651 = vmatprep.subr.mxu0 0.0
    %652 = vmatpush2.msra.mxu0 %v574
    %653 = vmatprep.subr.mxu0 0.0
    %654 = vmatpush2.msra.mxu0 %v573
    %655 = vmatprep.subr.mxu0 0.0
    %656 = vmatpush2.msra.mxu0 %v572
    %657 = vmatprep.subr.mxu0 0.0
    %658 = vmatpush2.msra.mxu0 %v571
    %659 = vmatprep.subr.mxu0 0.0
    %660 = vmatpush2.msra.mxu0 %v570
    %661 = vmatprep.subr.mxu0 0.0
    %662 = vmatpush2.msra.mxu0 %v569
    %663 = vmatprep.subr.mxu0 0.0
    %664 = vmatpush2.msra.mxu0 %v568
    %665 = vmatprep.subr.mxu0 0.0
    %666 = vmatpush2.msra.mxu0 %v567
    %667 = vmatprep.subr.mxu0 0.0
    %668 = vmatpush2.msra.mxu0 %v566
    %669 = vmatprep.subr.mxu0 0.0
    %670 = vmatpush2.msra.mxu0 %v565
    %671 = vmatprep.subr.mxu0 0.0
    %672 = vmatpush2.msra.mxu0 %v564
    %673 = vmatprep.subr.mxu0 0.0
    %674 = vmatpush2.msra.mxu0 %v563
    %675 = vmatprep.mubr.f32.mxu0 %v540
    %676 = vmatmul.mubr.f32.gmra.mxu0 %v539
    %v677 = vpop.f32.mrf.mxu0
    %v678 = vadd.f32 0.0, %v677
    %v679 = vpop.f32.mrf.mxu0
    %680 = vmatprep.mubr.f32.mxu0 %v544
    %681 = vmatmul.mubr.f32.gmra.mxu0 %v543
    %v682 = vpop.f32.mrf.mxu0
    %v683 = vadd.f32 0.0, %v682
    %v684 = vpop.f32.mrf.mxu0
    %685 = vdwg.mxu0
    %686 = vmatprep.subr.mxu0 0.0
    %687 = vmatpush1.msra.mxu0 %v594
    %688 = vmatprep.subr.mxu0 0.0
    %689 = vmatpush1.msra.mxu0 %v593
    %690 = vmatprep.subr.mxu0 0.0
    %691 = vmatpush1.msra.mxu0 %v592
    %692 = vmatprep.subr.mxu0 0.0
    %693 = vmatpush1.msra.mxu0 %v591
    %694 = vmatprep.subr.mxu0 0.0
    %695 = vmatpush1.msra.mxu0 %v590
    %696 = vmatprep.subr.mxu0 0.0
    %697 = vmatpush1.msra.mxu0 %v589
    %698 = vmatprep.subr.mxu0 0.0
    %699 = vmatpush1.msra.mxu0 %v588
    %700 = vmatprep.subr.mxu0 0.0
    %701 = vmatpush1.msra.mxu0 %v587
    %702 = vmatprep.subr.mxu0 0.0
    %703 = vmatpush1.msra.mxu0 %v586
    %704 = vmatprep.subr.mxu0 0.0
    %705 = vmatpush1.msra.mxu0 %v585
    %706 = vmatprep.subr.mxu0 0.0
    %707 = vmatpush1.msra.mxu0 %v584
    %708 = vmatprep.subr.mxu0 0.0
    %709 = vmatpush1.msra.mxu0 %v583
    %710 = vmatprep.subr.mxu0 0.0
    %711 = vmatpush1.msra.mxu0 %v582
    %712 = vmatprep.subr.mxu0 0.0
    %713 = vmatpush1.msra.mxu0 %v581
    %714 = vmatprep.subr.mxu0 0.0
    %715 = vmatpush1.msra.mxu0 %v580
    %716 = vmatprep.subr.mxu0 0.0
    %717 = vmatpush1.msra.mxu0 %v579
    %718 = vmatprep.subr.mxu0 0.0
    %719 = vmatpush2.msra.mxu0 %v610
    %720 = vmatprep.subr.mxu0 0.0
    %721 = vmatpush2.msra.mxu0 %v609
    %722 = vmatprep.subr.mxu0 0.0
    %723 = vmatpush2.msra.mxu0 %v608
    %724 = vmatprep.subr.mxu0 0.0
    %725 = vmatpush2.msra.mxu0 %v607
    %726 = vmatprep.subr.mxu0 0.0
    %727 = vmatpush2.msra.mxu0 %v606
    %728 = vmatprep.subr.mxu0 0.0
    %729 = vmatpush2.msra.mxu0 %v605
    %730 = vmatprep.subr.mxu0 0.0
    %731 = vmatpush2.msra.mxu0 %v604
    %732 = vmatprep.subr.mxu0 0.0
    %733 = vmatpush2.msra.mxu0 %v603
    %734 = vmatprep.subr.mxu0 0.0
    %735 = vmatpush2.msra.mxu0 %v602
    %736 = vmatprep.subr.mxu0 0.0
    %737 = vmatpush2.msra.mxu0 %v601
    %738 = vmatprep.subr.mxu0 0.0
    %739 = vmatpush2.msra.mxu0 %v600
    %740 = vmatprep.subr.mxu0 0.0
    %741 = vmatpush2.msra.mxu0 %v599
    %742 = vmatprep.subr.mxu0 0.0
    %743 = vmatpush2.msra.mxu0 %v598
    %744 = vmatprep.subr.mxu0 0.0
    %745 = vmatpush2.msra.mxu0 %v597
    %746 = vmatprep.subr.mxu0 0.0
    %747 = vmatpush2.msra.mxu0 %v596
    %748 = vmatprep.subr.mxu0 0.0
    %749 = vmatpush2.msra.mxu0 %v595
    %750 = vmatprep.mubr.f32.mxu0 %v542
    %751 = vmatmul.mubr.f32.gmra.mxu0 %v541
    %v752 = vpop.f32.mrf.mxu0
    %v753 = vadd.f32 %v678, %v752
    %v754 = vpop.f32.mrf.mxu0
    %755 = vmatprep.mubr.f32.mxu0 %v546
    %756 = vmatmul.mubr.f32.gmra.mxu0 %v545
    %v757 = vpop.f32.mrf.mxu0
    %v758 = vadd.f32 %v683, %v757
    %v759 = vpop.f32.mrf.mxu0
    %760 = vdwg.mxu0
    %v761 = vadd.f32 %v21, %v753
    %v762 = vadd.f32 %v22, %v758
    %763 = vst [vmem:[#allocation2] sm:$0xff] %v761
    %764 = vst [vmem:[#allocation2 + $0x8] sm:$0xff] %v762
    // Predicated region
    $region22: #{transformer_block_forward.7} parent=1 // pred_check
      _
    $region23: #{transformer_block_forward.7} parent=1 // pred_check_branch
      %766 = sbr.rel (0) target = $region25
    $region24: #{transformer_block_forward.7} parent=1 // pred_region
      %s768 = ssub.s32 256, 256
      %769 = vsyncadd [#allocation3], %s768
      %s770 = sshll.u32 [#allocation2], 4
      %s771 = int_to_ptr.vmem [resolvable:$true] %s770
      %776 = dma.vmem_to_hbm [thread:$0]  %s771, 256, %s5, [#allocation3], 128, 128, 8
    $region25: #{transformer_block_forward.7} parent=1 // pred_fallthru
      _
    // Predicated region
    $region26: #{transformer_block_forward.7} parent=1 // pred_check
      _
    $region27: #{transformer_block_forward.7} parent=1 // pred_check_branch
      %778 = sbr.rel (0) target = $region29
    $region28: #{transformer_block_forward.7} parent=1 // pred_region
      %779 = dma.done [#allocation3], 256
    $region29: #{transformer_block_forward.7} parent=1 // pred_fallthru
      _
    %780 = vsyncpa [#allocation3], 1

// kernel: transformer_block_forward.5
$region0: #{transformer_block_forward.5}
  #allocation0 [shape = 'u32[]', space=smem, size = 0x4, offset = 0x4, fixed_abs, tag = 'smem constant byte address 0x4 - core index']
  #allocation1 [shape = 'u32[144,128]{1,0:T(1,128)}', space=vmem, size = 0x12000, scoped, tag = 'internal scratch']
  %s0 = inlined_call_operand.vmem [shape: f32[2,8,4,32], index: 0, kind: input, shape index: {}]
  %s1 = inlined_call_operand.vmem [shape: f32[2,8,2,32], index: 1, kind: input, shape index: {}]
  %s2 = inlined_call_operand.vmem [shape: f32[2,8,2,32], index: 2, kind: input, shape index: {}]
  %s3 = inlined_call_operand.vmem [shape: f32[2,8,128], index: 3, kind: output, shape index: {}]
  %s4 = sld [smem:[#allocation0]]
  $region45: #{transformer_block_forward.5} parent=0
    _
  %s6 = ssub.s32 1, %s4
  %s7 = scalar_select 0, %s6, %s4
  loop: start=0, step=1, limit=4
  $region2: #{transformer_block_forward.5} parent=0 // loop_pre_header
    _
  $region3: #{transformer_block_forward.5} parent=0 // loop_header
    %s9 = sphi 0, %s13
    %p10 = scmp.ge.s32.totalorder %s9, 4
    %s19 = sphi 0, %s21
    %s22 = sphi 0, %s19
    %s23 = sphi 0, %s22
    %s39 = sphi 0, %s23
    %s45 = sphi 0, %s47
    %s48 = sphi 0, %s45
    %s49 = sphi 0, %s48
    %s65 = sphi 0, %s49
    %s71 = sphi 0, %s73
    %s74 = sphi 0, %s71
    %s75 = sphi 0, %s74
    %s91 = sphi 0, %s75
    %s97 = sphi 0, %s99
    %s100 = sphi 0, %s97
    %s101 = sphi 0, %s100
    %s117 = sphi 0, %s101
  $region4: #{transformer_block_forward.5} parent=0 // loop_header_branch
    %12 = sbr.rel (%p10) target = $region8
  $region5: #{transformer_block_forward.5} parent=0 // loop_body
    %s14 = ssub.s32 %s9, 1
    %s15 = ssub.s32 %s9, 2
    %s16 = sadd.s32 %s9, 1
    %s17 = ssub.s32 %s9, %s16
    %p18 = scmp.eq.s32.totalorder %s17, 0
    %s20 = sadd.s32 %s19, 1
    %s21 = scalar_select %p18, %s19, %s20
    %p24 = pneg %p18
    %p25 = scmp.eq.s32.totalorder %s9, 1
    %p26 = por %p24, %p25
    %p27 = scmp.ne.s32.totalorder %s19, %s22
    %p28 = scmp.eq.s32.totalorder %s9, 0
    %p29 = por %p27, %p28
    %p30 = scmp.ne.s32.totalorder %s19, %s22
    %p31 = scmp.eq.s32.totalorder %s14, 1
    %p32 = por %p30, %p31
    %p33 = scmp.ne.s32.totalorder %s22, %s23
    %p34 = scmp.eq.s32.totalorder %s14, 0
    %p35 = por %p33, %p34
    %p36 = scmp.ne.s32.totalorder %s22, %s23
    %p37 = scmp.eq.s32.totalorder %s15, 1
    %p38 = por %p36, %p37
    %p40 = scmp.ne.s32.totalorder %s23, %s39
    %p41 = scmp.eq.s32.totalorder %s15, 0
    %p42 = por %p40, %p41
    %s43 = ssub.s32 %s9, %s16
    %p44 = scmp.eq.s32.totalorder %s43, 0
    %s46 = sadd.s32 %s45, 1
    %s47 = scalar_select %p44, %s45, %s46
    %p50 = pneg %p44
    %p51 = scmp.eq.s32.totalorder %s9, 1
    %p52 = por %p50, %p51
    %p53 = scmp.ne.s32.totalorder %s45, %s48
    %p54 = scmp.eq.s32.totalorder %s9, 0
    %p55 = por %p53, %p54
    %p56 = scmp.ne.s32.totalorder %s45, %s48
    %p57 = scmp.eq.s32.totalorder %s14, 1
    %p58 = por %p56, %p57
    %p59 = scmp.ne.s32.totalorder %s48, %s49
    %p60 = scmp.eq.s32.totalorder %s14, 0
    %p61 = por %p59, %p60
    %p62 = scmp.ne.s32.totalorder %s48, %s49
    %p63 = scmp.eq.s32.totalorder %s15, 1
    %p64 = por %p62, %p63
    %p66 = scmp.ne.s32.totalorder %s49, %s65
    %p67 = scmp.eq.s32.totalorder %s15, 0
    %p68 = por %p66, %p67
    %s69 = ssub.s32 %s9, %s16
    %p70 = scmp.eq.s32.totalorder %s69, 0
    %s72 = sadd.s32 %s71, 1
    %s73 = scalar_select %p70, %s71, %s72
    %p76 = pneg %p70
    %p77 = scmp.eq.s32.totalorder %s9, 1
    %p78 = por %p76, %p77
    %p79 = scmp.ne.s32.totalorder %s71, %s74
    %p80 = scmp.eq.s32.totalorder %s9, 0
    %p81 = por %p79, %p80
    %p82 = scmp.ne.s32.totalorder %s71, %s74
    %p83 = scmp.eq.s32.totalorder %s14, 1
    %p84 = por %p82, %p83
    %p85 = scmp.ne.s32.totalorder %s74, %s75
    %p86 = scmp.eq.s32.totalorder %s14, 0
    %p87 = por %p85, %p86
    %p88 = scmp.ne.s32.totalorder %s74, %s75
    %p89 = scmp.eq.s32.totalorder %s15, 1
    %p90 = por %p88, %p89
    %p92 = scmp.ne.s32.totalorder %s75, %s91
    %p93 = scmp.eq.s32.totalorder %s15, 0
    %p94 = por %p92, %p93
    %s95 = ssub.s32 %s9, %s16
    %p96 = scmp.eq.s32.totalorder %s95, 0
    %s98 = sadd.s32 %s97, 1
    %s99 = scalar_select %p96, %s97, %s98
    %p102 = pneg %p96
    %p103 = scmp.eq.s32.totalorder %s9, 1
    %p104 = por %p102, %p103
    %p105 = scmp.ne.s32.totalorder %s97, %s100
    %p106 = scmp.eq.s32.totalorder %s9, 0
    %p107 = por %p105, %p106
    %p108 = scmp.ne.s32.totalorder %s97, %s100
    %p109 = scmp.eq.s32.totalorder %s14, 1
    %p110 = por %p108, %p109
    %p111 = scmp.ne.s32.totalorder %s100, %s101
    %p112 = scmp.eq.s32.totalorder %s14, 0
    %p113 = por %p111, %p112
    %p114 = scmp.ne.s32.totalorder %s100, %s101
    %p115 = scmp.eq.s32.totalorder %s15, 1
    %p116 = por %p114, %p115
    %p118 = scmp.ne.s32.totalorder %s101, %s117
    %p119 = scmp.eq.s32.totalorder %s15, 0
    %p120 = por %p118, %p119
    %p121 = scmp.le.s32.totalorder 1, %s9
    %p122 = scmp.lt.s32.totalorder %s9, 3
    %p123 = pnand %p121, %p122
    %p124 = pneg %p123
    // Predicated region
    $region9: #{transformer_block_forward.5} parent=5 // pred_check
      _
    $region10: #{transformer_block_forward.5} parent=5 // pred_check_branch
      %126 = sbr.rel (%p123) target = $region12
    $region11: #{transformer_block_forward.5} parent=5 // pred_region
      %s127 = ssub.s32 %s9, 1
    $region12: #{transformer_block_forward.5} parent=5 // pred_fallthru
      _
    %p128 = scmp.lt.s32.totalorder %s9, 2
    // Predicated region
    $region13: #{transformer_block_forward.5} parent=5 // pred_check
      %p129 = pneg %p128
    $region14: #{transformer_block_forward.5} parent=5 // pred_check_branch
      %131 = sbr.rel (%p129) target = $region16
    $region15: #{transformer_block_forward.5} parent=5 // pred_region
      // Predicated region
      $region17: #{transformer_block_forward.5} parent=15 // pred_check
        %p132 = pneg %p29
      $region18: #{transformer_block_forward.5} parent=15 // pred_check_branch
        %134 = sbr.rel (%p132) target = $region20
      $region19: #{transformer_block_forward.5} parent=15 // pred_region
        %p135 = scmp.lt.s32.totalorder %s9, 1
        %s136 = scalar_select %p135, %s9, 1
        %s137 = smul.addr %s136, 8
        %s138 = smul.addr %s137, 4
        %s139 = scalar_lea.vmem %s0, %s138
      $region20: #{transformer_block_forward.5} parent=15 // pred_fallthru
        _
      // Predicated region
      $region21: #{transformer_block_forward.5} parent=15 // pred_check
        %p140 = pneg %p55
      $region22: #{transformer_block_forward.5} parent=15 // pred_check_branch
        %142 = sbr.rel (%p140) target = $region24
      $region23: #{transformer_block_forward.5} parent=15 // pred_region
        %p143 = scmp.lt.s32.totalorder %s9, 1
        %s144 = scalar_select %p143, %s9, 1
        %s145 = smul.addr %s144, 8
        %s146 = smul.addr %s145, 2
        %s147 = scalar_lea.vmem %s1, %s146
      $region24: #{transformer_block_forward.5} parent=15 // pred_fallthru
        _
      // Predicated region
      $region25: #{transformer_block_forward.5} parent=15 // pred_check
        %p148 = pneg %p81
      $region26: #{transformer_block_forward.5} parent=15 // pred_check_branch
        %150 = sbr.rel (%p148) target = $region28
      $region27: #{transformer_block_forward.5} parent=15 // pred_region
        %p151 = scmp.lt.s32.totalorder %s9, 1
        %s152 = scalar_select %p151, %s9, 1
        %s153 = smul.addr %s152, 8
        %s154 = smul.addr %s153, 2
        %s155 = scalar_lea.vmem %s2, %s154
      $region28: #{transformer_block_forward.5} parent=15 // pred_fallthru
        _
    $region16: #{transformer_block_forward.5} parent=5 // pred_fallthru
      _
    %p156 = scmp.le.s32.totalorder 1, %s9
    %p157 = scmp.lt.s32.totalorder %s9, 3
    %p158 = pnand %p156, %p157
    %p159 = pneg %p158
    // Predicated region
    $region29: #{transformer_block_forward.5} parent=5 // pred_check
      _
    $region30: #{transformer_block_forward.5} parent=5 // pred_check_branch
      %161 = sbr.rel (%p158) target = $region32
    $region31: #{transformer_block_forward.5} parent=5 // pred_region
      %s162 = ssub.s32 %s9, 1
      %p163 = scmp.lt.s32.totalorder %s14, 1
      %s164 = scalar_select %p163, %s14, 1
      %s165 = smul.addr %s164, 8
      %s166 = smul.addr %s165, 4
      %s167 = scalar_lea.vmem %s0, %s166
      %p168 = pneg %p35
      %p169 = pneg %p32
      %p170 = scmp.lt.s32.totalorder %s14, 1
      %s171 = scalar_select %p170, %s14, 1
      %s172 = smul.addr %s171, 8
      %s173 = smul.addr %s172, 2
      %s174 = scalar_lea.vmem %s1, %s173
      %p175 = pneg %p61
      %p176 = pneg %p58
      %p177 = scmp.lt.s32.totalorder %s14, 1
      %s178 = scalar_select %p177, %s14, 1
      %s179 = smul.addr %s178, 8
      %s180 = smul.addr %s179, 2
      %s181 = scalar_lea.vmem %s2, %s180
      %p182 = pneg %p87
      %p183 = pneg %p84
      %p184 = pneg %p113
      %p185 = pneg %p110
      %p186 = scmp.lt.s32.totalorder %s14, 1
      %s187 = scalar_select %p186, %s14, 1
      %s188 = smul.addr %s187, 8
      %s189 = scalar_lea.vmem %s3, %s188
      %p190 = scmp.lt.s32.totalorder %s14, 1
      %s191 = scalar_select %p190, %s14, 1
      %s192 = smul.addr %s191, 8
      %s193 = smul.addr %s192, 4
      %s194 = scalar_lea.vmem %s0, %s193
      %p195 = scmp.lt.s32.totalorder %s14, 1
      %s196 = scalar_select %p195, %s14, 1
      %s197 = smul.addr %s196, 8
      %s198 = smul.addr %s197, 2
      %s199 = scalar_lea.vmem %s1, %s198
      %p200 = scmp.lt.s32.totalorder %s14, 1
      %s201 = scalar_select %p200, %s14, 1
      %s202 = smul.addr %s201, 8
      %s203 = smul.addr %s202, 2
      %s204 = scalar_lea.vmem %s2, %s203
      %p205 = scmp.lt.s32.totalorder %s14, 1
      %s206 = scalar_select %p205, %s14, 1
      %s207 = smul.addr %s206, 8
      %s208 = scalar_lea.vmem %s3, %s207
      %v209 = vld [vmem:[%s194] sm:$0xf]
      %v210 = vld [vmem:[%s194 + $0x4] sm:$0xf]
      %v211 = vld [vmem:[%s194 + $0x8] sm:$0xf]
      %v212 = vld [vmem:[%s194 + $0xc] sm:$0xf]
      %v213 = vld [vmem:[%s194 + $0x10] sm:$0xf]
      %v214 = vld [vmem:[%s194 + $0x14] sm:$0xf]
      %v215 = vld [vmem:[%s194 + $0x18] sm:$0xf]
      %v216 = vld [vmem:[%s194 + $0x1c] sm:$0xf]
      %v217 = vld [vmem:[%s199] sm:$0x3]
      %v218 = vld [vmem:[%s199 + $0x2] sm:$0x3]
      %v219 = vld [vmem:[%s199 + $0x4] sm:$0x3]
      %v220 = vld [vmem:[%s199 + $0x6] sm:$0x3]
      %v221 = vld [vmem:[%s199 + $0x8] sm:$0x3]
      %v222 = vld [vmem:[%s199 + $0xa] sm:$0x3]
      %v223 = vld [vmem:[%s199 + $0xc] sm:$0x3]
      %v224 = vld [vmem:[%s199 + $0xe] sm:$0x3]
      %v225 = vld [vmem:[%s204] sm:$0x3]
      %v226 = vld [vmem:[%s204 + $0x2] sm:$0x3]
      %v227 = vld [vmem:[%s204 + $0x4] sm:$0x3]
      %v228 = vld [vmem:[%s204 + $0x6] sm:$0x3]
      %v229 = vld [vmem:[%s204 + $0x8] sm:$0x3]
      %v230 = vld [vmem:[%s204 + $0xa] sm:$0x3]
      %v231 = vld [vmem:[%s204 + $0xc] sm:$0x3]
      %v232 = vld [vmem:[%s204 + $0xe] sm:$0x3]
      %v233 = vlaneseq
      %v234 = vshrl.u32 %v233, 7
      %v235 = vlaneseq
      %v236 = vand.u32 %v235, 127
      %vm237 = vcmp.le.s32.totalorder %v236, %v234
      %v246 = vrot.slane %v210, 7
      %vm247 = vcmask 1041409
      %v248 = vsel %vm247, %v246, %v209
      %v249 = vrot.slane %v211, 6
      %vm250 = vcmask 1042434
      %v251 = vsel %vm250, %v249, %v248
      %v252 = vrot.slane %v212, 5
      %vm253 = vcmask 1043459
      %v254 = vsel %vm253, %v252, %v251
      %v255 = vrot.slane %v213, 4
      %vm256 = vcmask 1044484
      %v257 = vsel %vm256, %v255, %v254
      %v258 = vrot.slane %v214, 3
      %vm259 = vcmask 1045509
      %v260 = vsel %vm259, %v258, %v257
      %v261 = vrot.slane %v215, 2
      %vm262 = vcmask 1046534
      %v263 = vsel %vm262, %v261, %v260
      %v264 = vrot.slane %v216, 1
      %vm265 = vcmask 1047559
      %v266 = vsel %vm265, %v264, %v263
      %v275 = vrot.slane %v218, 7
      %v276 = vsel %vm247, %v275, %v217
      %v277 = vrot.slane %v219, 6
      %v278 = vsel %vm250, %v277, %v276
      %v279 = vrot.slane %v220, 5
      %v280 = vsel %vm253, %v279, %v278
      %v281 = vrot.slane %v221, 4
      %v282 = vsel %vm256, %v281, %v280
      %v283 = vrot.slane %v222, 3
      %v284 = vsel %vm259, %v283, %v282
      %v285 = vrot.slane %v223, 2
      %v286 = vsel %vm262, %v285, %v284
      %v287 = vrot.slane %v224, 1
      %v288 = vsel %vm265, %v287, %v286
      %vm289 = vcmask 261120
      %v290 = vsel %vm289, %v266, 0
      %v292 = vsel %vm289, %v288, 0
      %294 = vmatprep.subr.mxu0 0.0
      %295 = vmatpush1.xpose.msra.mxu0 0.0
      %296 = vmatprep.subr.mxu0 0.0
      %297 = vmatpush1.xpose.msra.mxu0 0.0
      %298 = vmatprep.subr.mxu0 0.0
      %299 = vmatpush1.xpose.msra.mxu0 0.0
      %300 = vmatprep.subr.mxu0 0.0
      %301 = vmatpush1.xpose.msra.mxu0 0.0
      %302 = vmatprep.subr.mxu0 0.0
      %303 = vmatpush1.xpose.msra.mxu0 0.0
      %304 = vmatprep.subr.mxu0 0.0
      %305 = vmatpush1.xpose.msra.mxu0 0.0
      %306 = vmatprep.subr.mxu0 0.0
      %307 = vmatpush1.xpose.msra.mxu0 0.0
      %308 = vmatprep.subr.mxu0 0.0
      %309 = vmatpush1.xpose.msra.mxu0 0.0
      %310 = vmatprep.subr.mxu0 0.0
      %311 = vmatpush1.xpose.msra.mxu0 0.0
      %312 = vmatprep.subr.mxu0 0.0
      %313 = vmatpush1.xpose.msra.mxu0 0.0
      %314 = vmatprep.subr.mxu0 0.0
      %315 = vmatpush1.xpose.msra.mxu0 0.0
      %316 = vmatprep.subr.mxu0 0.0
      %317 = vmatpush1.xpose.msra.mxu0 0.0
      %318 = vmatprep.subr.mxu0 0.0
      %319 = vmatpush1.xpose.msra.mxu0 0.0
      %320 = vmatprep.subr.mxu0 0.0
      %321 = vmatpush1.xpose.msra.mxu0 0.0
      %322 = vmatprep.subr.mxu0 0.0
      %323 = vmatpush1.xpose.msra.mxu0 0.0
      %324 = vmatprep.subr.mxu0 0.0
      %325 = vmatpush1.xpose.msra.mxu0 %v292
      %326 = vmatprep.subr.mxu0 0.0
      %327 = vmatpush2.xpose.msra.mxu0 0.0
      %328 = vmatprep.subr.mxu0 0.0
      %329 = vmatpush2.xpose.msra.mxu0 0.0
      %330 = vmatprep.subr.mxu0 0.0
      %331 = vmatpush2.xpose.msra.mxu0 0.0
      %332 = vmatprep.subr.mxu0 0.0
      %333 = vmatpush2.xpose.msra.mxu0 0.0
      %334 = vmatprep.subr.mxu0 0.0
      %335 = vmatpush2.xpose.msra.mxu0 0.0
      %336 = vmatprep.subr.mxu0 0.0
      %337 = vmatpush2.xpose.msra.mxu0 0.0
      %338 = vmatprep.subr.mxu0 0.0
      %339 = vmatpush2.xpose.msra.mxu0 0.0
      %340 = vmatprep.subr.mxu0 0.0
      %341 = vmatpush2.xpose.msra.mxu0 0.0
      %342 = vmatprep.subr.mxu0 0.0
      %343 = vmatpush2.xpose.msra.mxu0 0.0
      %344 = vmatprep.subr.mxu0 0.0
      %345 = vmatpush2.xpose.msra.mxu0 0.0
      %346 = vmatprep.subr.mxu0 0.0
      %347 = vmatpush2.xpose.msra.mxu0 0.0
      %348 = vmatprep.subr.mxu0 0.0
      %349 = vmatpush2.xpose.msra.mxu0 0.0
      %350 = vmatprep.subr.mxu0 0.0
      %351 = vmatpush2.xpose.msra.mxu0 0.0
      %352 = vmatprep.subr.mxu0 0.0
      %353 = vmatpush2.xpose.msra.mxu0 0.0
      %354 = vmatprep.subr.mxu0 0.0
      %355 = vmatpush2.xpose.msra.mxu0 0.0
      %356 = vmatprep.subr.mxu0 0.0
      %357 = vmatpush2.xpose.msra.mxu0 0.0
      %358 = vmatprep.mubr.f32.mxu0 0.0
      %359 = vmatmul.mubr.f32.gmra.mxu0 %v290
      %v360 = vpop.f32.mrf.mxu0
      %v361 = vadd.f32 0.0, %v360
      %v362 = vpop.f32.mrf.mxu0
      %363 = vdwg.mxu0
      %v364 = vmul.f32 %v361, 0.17677669
      %v365 = vsel %vm237, %v364, -1e+30
      %vm366 = vcmask 64512
      %v367 = vsel %vm366, %v365, -inf
      %368 = vmax.xlane.f32.xlu0 %v367
      %v369 = vpop.xlane.xlu0 %368
      %v370 = vsub.f32 %v365, %v369
      %v371 = vmul.f32 %v370, 1.442695
      %v372 = vpow.pop %v371
      %v373 = vsel %vm366, %v372, 0.0
      %374 = vadd.xlane.f32.xlu0 %v373
      %v375 = vpop.xlane.xlu0 %374
      %v376 = vrcp.pop %v375
      %v377 = vmul.f32 %v372, %v376
      %v386 = vrot.slane %v226, 7
      %v387 = vsel %vm247, %v386, %v225
      %v388 = vrot.slane %v227, 6
      %v389 = vsel %vm250, %v388, %v387
      %v390 = vrot.slane %v228, 5
      %v391 = vsel %vm253, %v390, %v389
      %v392 = vrot.slane %v229, 4
      %v393 = vsel %vm256, %v392, %v391
      %v394 = vrot.slane %v230, 3
      %v395 = vsel %vm259, %v394, %v393
      %v396 = vrot.slane %v231, 2
      %v397 = vsel %vm262, %v396, %v395
      %v398 = vrot.slane %v232, 1
      %v399 = vsel %vm265, %v398, %v397
      %v402 = vsel %vm366, %v377, 0
      %404 = vmatprep.subr.mxu0 0.0
      %405 = vmatpush1.msra.mxu0 0.0
      %406 = vmatprep.subr.mxu0 0.0
      %407 = vmatpush1.msra.mxu0 0.0
      %408 = vmatprep.subr.mxu0 0.0
      %409 = vmatpush1.msra.mxu0 0.0
      %410 = vmatprep.subr.mxu0 0.0
      %411 = vmatpush1.msra.mxu0 0.0
      %412 = vmatprep.subr.mxu0 0.0
      %413 = vmatpush1.msra.mxu0 0.0
      %414 = vmatprep.subr.mxu0 0.0
      %415 = vmatpush1.msra.mxu0 0.0
      %416 = vmatprep.subr.mxu0 0.0
      %417 = vmatpush1.msra.mxu0 0.0
      %418 = vmatprep.subr.mxu0 0.0
      %419 = vmatpush1.msra.mxu0 0.0
      %420 = vmatprep.subr.mxu0 0.0
      %421 = vmatpush1.msra.mxu0 0.0
      %422 = vmatprep.subr.mxu0 0.0
      %423 = vmatpush1.msra.mxu0 0.0
      %424 = vmatprep.subr.mxu0 0.0
      %425 = vmatpush1.msra.mxu0 0.0
      %426 = vmatprep.subr.mxu0 0.0
      %427 = vmatpush1.msra.mxu0 0.0
      %428 = vmatprep.subr.mxu0 0.0
      %429 = vmatpush1.msra.mxu0 0.0
      %430 = vmatprep.subr.mxu0 0.0
      %431 = vmatpush1.msra.mxu0 0.0
      %432 = vmatprep.subr.mxu0 0.0
      %433 = vmatpush1.msra.mxu0 0.0
      %434 = vmatprep.subr.mxu0 0.0
      %435 = vmatpush1.msra.mxu0 %v399
      %436 = vmatprep.subr.mxu0 0.0
      %437 = vmatpush2.msra.mxu0 0.0
      %438 = vmatprep.subr.mxu0 0.0
      %439 = vmatpush2.msra.mxu0 0.0
      %440 = vmatprep.subr.mxu0 0.0
      %441 = vmatpush2.msra.mxu0 0.0
      %442 = vmatprep.subr.mxu0 0.0
      %443 = vmatpush2.msra.mxu0 0.0
      %444 = vmatprep.subr.mxu0 0.0
      %445 = vmatpush2.msra.mxu0 0.0
      %446 = vmatprep.subr.mxu0 0.0
      %447 = vmatpush2.msra.mxu0 0.0
      %448 = vmatprep.subr.mxu0 0.0
      %449 = vmatpush2.msra.mxu0 0.0
      %450 = vmatprep.subr.mxu0 0.0
      %451 = vmatpush2.msra.mxu0 0.0
      %452 = vmatprep.subr.mxu0 0.0
      %453 = vmatpush2.msra.mxu0 0.0
      %454 = vmatprep.subr.mxu0 0.0
      %455 = vmatpush2.msra.mxu0 0.0
      %456 = vmatprep.subr.mxu0 0.0
      %457 = vmatpush2.msra.mxu0 0.0
      %458 = vmatprep.subr.mxu0 0.0
      %459 = vmatpush2.msra.mxu0 0.0
      %460 = vmatprep.subr.mxu0 0.0
      %461 = vmatpush2.msra.mxu0 0.0
      %462 = vmatprep.subr.mxu0 0.0
      %463 = vmatpush2.msra.mxu0 0.0
      %464 = vmatprep.subr.mxu0 0.0
      %465 = vmatpush2.msra.mxu0 0.0
      %466 = vmatprep.subr.mxu0 0.0
      %467 = vmatpush2.msra.mxu0 0.0
      %468 = vmatprep.mubr.f32.mxu0 0.0
      %469 = vmatmul.mubr.f32.gmra.mxu0 %v402
      %v470 = vpop.f32.mrf.mxu0
      %v471 = vadd.f32 0.0, %v470
      %v472 = vpop.f32.mrf.mxu0
      %473 = vdwg.mxu0
      %v474 = vrot.slane %v209, 1
      %v475 = vsel %vm247, %v210, %v474
      %v476 = vrot.slane %v211, 7
      %v477 = vsel %vm250, %v476, %v475
      %v478 = vrot.slane %v212, 6
      %v479 = vsel %vm253, %v478, %v477
      %v480 = vrot.slane %v213, 5
      %v481 = vsel %vm256, %v480, %v479
      %v482 = vrot.slane %v214, 4
      %v483 = vsel %vm259, %v482, %v481
      %v484 = vrot.slane %v215, 3
      %v485 = vsel %vm262, %v484, %v483
      %v486 = vrot.slane %v216, 2
      %v487 = vsel %vm265, %v486, %v485
      %v488 = vsel %vm289, %v487, 0
      %490 = vmatprep.subr.mxu0 0.0
      %491 = vmatpush1.xpose.msra.mxu0 0.0
      %492 = vmatprep.subr.mxu0 0.0
      %493 = vmatpush1.xpose.msra.mxu0 0.0
      %494 = vmatprep.subr.mxu0 0.0
      %495 = vmatpush1.xpose.msra.mxu0 0.0
      %496 = vmatprep.subr.mxu0 0.0
      %497 = vmatpush1.xpose.msra.mxu0 0.0
      %498 = vmatprep.subr.mxu0 0.0
      %499 = vmatpush1.xpose.msra.mxu0 0.0
      %500 = vmatprep.subr.mxu0 0.0
      %501 = vmatpush1.xpose.msra.mxu0 0.0
      %502 = vmatprep.subr.mxu0 0.0
      %503 = vmatpush1.xpose.msra.mxu0 0.0
      %504 = vmatprep.subr.mxu0 0.0
      %505 = vmatpush1.xpose.msra.mxu0 0.0
      %506 = vmatprep.subr.mxu0 0.0
      %507 = vmatpush1.xpose.msra.mxu0 0.0
      %508 = vmatprep.subr.mxu0 0.0
      %509 = vmatpush1.xpose.msra.mxu0 0.0
      %510 = vmatprep.subr.mxu0 0.0
      %511 = vmatpush1.xpose.msra.mxu0 0.0
      %512 = vmatprep.subr.mxu0 0.0
      %513 = vmatpush1.xpose.msra.mxu0 0.0
      %514 = vmatprep.subr.mxu0 0.0
      %515 = vmatpush1.xpose.msra.mxu0 0.0
      %516 = vmatprep.subr.mxu0 0.0
      %517 = vmatpush1.xpose.msra.mxu0 0.0
      %518 = vmatprep.subr.mxu0 0.0
      %519 = vmatpush1.xpose.msra.mxu0 0.0
      %520 = vmatprep.subr.mxu0 0.0
      %521 = vmatpush1.xpose.msra.mxu0 %v292
      %522 = vmatprep.subr.mxu0 0.0
      %523 = vmatpush2.xpose.msra.mxu0 0.0
      %524 = vmatprep.subr.mxu0 0.0
      %525 = vmatpush2.xpose.msra.mxu0 0.0
      %526 = vmatprep.subr.mxu0 0.0
      %527 = vmatpush2.xpose.msra.mxu0 0.0
      %528 = vmatprep.subr.mxu0 0.0
      %529 = vmatpush2.xpose.msra.mxu0 0.0
      %530 = vmatprep.subr.mxu0 0.0
      %531 = vmatpush2.xpose.msra.mxu0 0.0
      %532 = vmatprep.subr.mxu0 0.0
      %533 = vmatpush2.xpose.msra.mxu0 0.0
      %534 = vmatprep.subr.mxu0 0.0
      %535 = vmatpush2.xpose.msra.mxu0 0.0
      %536 = vmatprep.subr.mxu0 0.0
      %537 = vmatpush2.xpose.msra.mxu0 0.0
      %538 = vmatprep.subr.mxu0 0.0
      %539 = vmatpush2.xpose.msra.mxu0 0.0
      %540 = vmatprep.subr.mxu0 0.0
      %541 = vmatpush2.xpose.msra.mxu0 0.0
      %542 = vmatprep.subr.mxu0 0.0
      %543 = vmatpush2.xpose.msra.mxu0 0.0
      %544 = vmatprep.subr.mxu0 0.0
      %545 = vmatpush2.xpose.msra.mxu0 0.0
      %546 = vmatprep.subr.mxu0 0.0
      %547 = vmatpush2.xpose.msra.mxu0 0.0
      %548 = vmatprep.subr.mxu0 0.0
      %549 = vmatpush2.xpose.msra.mxu0 0.0
      %550 = vmatprep.subr.mxu0 0.0
      %551 = vmatpush2.xpose.msra.mxu0 0.0
      %552 = vmatprep.subr.mxu0 0.0
      %553 = vmatpush2.xpose.msra.mxu0 0.0
      %554 = vmatprep.mubr.f32.mxu0 0.0
      %555 = vmatmul.mubr.f32.gmra.mxu0 %v488
      %v556 = vpop.f32.mrf.mxu0
      %v557 = vadd.f32 0.0, %v556
      %v558 = vpop.f32.mrf.mxu0
      %559 = vdwg.mxu0
      %v560 = vmul.f32 %v557, 0.17677669
      %v561 = vsel %vm237, %v560, -1e+30
      %v562 = vsel %vm366, %v561, -inf
      %563 = vmax.xlane.f32.xlu0 %v562
      %v564 = vpop.xlane.xlu0 %563
      %v565 = vsub.f32 %v561, %v564
      %v566 = vmul.f32 %v565, 1.442695
      %v567 = vpow.pop %v566
      %v568 = vsel %vm366, %v567, 0.0
      %569 = vadd.xlane.f32.xlu0 %v568
      %v570 = vpop.xlane.xlu0 %569
      %v571 = vrcp.pop %v570
      %v572 = vmul.f32 %v567, %v571
      %v574 = vsel %vm366, %v572, 0
      %576 = vmatprep.subr.mxu0 0.0
      %577 = vmatpush1.msra.mxu0 0.0
      %578 = vmatprep.subr.mxu0 0.0
      %579 = vmatpush1.msra.mxu0 0.0
      %580 = vmatprep.subr.mxu0 0.0
      %581 = vmatpush1.msra.mxu0 0.0
      %582 = vmatprep.subr.mxu0 0.0
      %583 = vmatpush1.msra.mxu0 0.0
      %584 = vmatprep.subr.mxu0 0.0
      %585 = vmatpush1.msra.mxu0 0.0
      %586 = vmatprep.subr.mxu0 0.0
      %587 = vmatpush1.msra.mxu0 0.0
      %588 = vmatprep.subr.mxu0 0.0
      %589 = vmatpush1.msra.mxu0 0.0
      %590 = vmatprep.subr.mxu0 0.0
      %591 = vmatpush1.msra.mxu0 0.0
      %592 = vmatprep.subr.mxu0 0.0
      %593 = vmatpush1.msra.mxu0 0.0
      %594 = vmatprep.subr.mxu0 0.0
      %595 = vmatpush1.msra.mxu0 0.0
      %596 = vmatprep.subr.mxu0 0.0
      %597 = vmatpush1.msra.mxu0 0.0
      %598 = vmatprep.subr.mxu0 0.0
      %599 = vmatpush1.msra.mxu0 0.0
      %600 = vmatprep.subr.mxu0 0.0
      %601 = vmatpush1.msra.mxu0 0.0
      %602 = vmatprep.subr.mxu0 0.0
      %603 = vmatpush1.msra.mxu0 0.0
      %604 = vmatprep.subr.mxu0 0.0
      %605 = vmatpush1.msra.mxu0 0.0
      %606 = vmatprep.subr.mxu0 0.0
      %607 = vmatpush1.msra.mxu0 %v399
      %608 = vmatprep.subr.mxu0 0.0
      %609 = vmatpush2.msra.mxu0 0.0
      %610 = vmatprep.subr.mxu0 0.0
      %611 = vmatpush2.msra.mxu0 0.0
      %612 = vmatprep.subr.mxu0 0.0
      %613 = vmatpush2.msra.mxu0 0.0
      %614 = vmatprep.subr.mxu0 0.0
      %615 = vmatpush2.msra.mxu0 0.0
      %616 = vmatprep.subr.mxu0 0.0
      %617 = vmatpush2.msra.mxu0 0.0
      %618 = vmatprep.subr.mxu0 0.0
      %619 = vmatpush2.msra.mxu0 0.0
      %620 = vmatprep.subr.mxu0 0.0
      %621 = vmatpush2.msra.mxu0 0.0
      %622 = vmatprep.subr.mxu0 0.0
      %623 = vmatpush2.msra.mxu0 0.0
      %624 = vmatprep.subr.mxu0 0.0
      %625 = vmatpush2.msra.mxu0 0.0
      %626 = vmatprep.subr.mxu0 0.0
      %627 = vmatpush2.msra.mxu0 0.0
      %628 = vmatprep.subr.mxu0 0.0
      %629 = vmatpush2.msra.mxu0 0.0
      %630 = vmatprep.subr.mxu0 0.0
      %631 = vmatpush2.msra.mxu0 0.0
      %632 = vmatprep.subr.mxu0 0.0
      %633 = vmatpush2.msra.mxu0 0.0
      %634 = vmatprep.subr.mxu0 0.0
      %635 = vmatpush2.msra.mxu0 0.0
      %636 = vmatprep.subr.mxu0 0.0
      %637 = vmatpush2.msra.mxu0 0.0
      %638 = vmatprep.subr.mxu0 0.0
      %639 = vmatpush2.msra.mxu0 0.0
      %640 = vmatprep.mubr.f32.mxu0 0.0
      %641 = vmatmul.mubr.f32.gmra.mxu0 %v574
      %v642 = vpop.f32.mrf.mxu0
      %v643 = vadd.f32 0.0, %v642
      %v644 = vpop.f32.mrf.mxu0
      %645 = vdwg.mxu0
      %v646 = vrot.slane %v209, 2
      %v647 = vrot.slane %v210, 1
      %v648 = vsel %vm247, %v647, %v646
      %v649 = vsel %vm250, %v211, %v648
      %v650 = vrot.slane %v212, 7
      %v651 = vsel %vm253, %v650, %v649
      %v652 = vrot.slane %v213, 6
      %v653 = vsel %vm256, %v652, %v651
      %v654 = vrot.slane %v214, 5
      %v655 = vsel %vm259, %v654, %v653
      %v656 = vrot.slane %v215, 4
      %v657 = vsel %vm262, %v656, %v655
      %v658 = vrot.slane %v216, 3
      %v659 = vsel %vm265, %v658, %v657
      %v660 = vrot.slane %v217, 1
      %v661 = vsel %vm247, %v218, %v660
      %v662 = vrot.slane %v219, 7
      %v663 = vsel %vm250, %v662, %v661
      %v664 = vrot.slane %v220, 6
      %v665 = vsel %vm253, %v664, %v663
      %v666 = vrot.slane %v221, 5
      %v667 = vsel %vm256, %v666, %v665
      %v668 = vrot.slane %v222, 4
      %v669 = vsel %vm259, %v668, %v667
      %v670 = vrot.slane %v223, 3
      %v671 = vsel %vm262, %v670, %v669
      %v672 = vrot.slane %v224, 2
      %v673 = vsel %vm265, %v672, %v671
      %v674 = vsel %vm289, %v659, 0
      %v676 = vsel %vm289, %v673, 0
      %678 = vmatprep.subr.mxu0 0.0
      %679 = vmatpush1.xpose.msra.mxu0 0.0
      %680 = vmatprep.subr.mxu0 0.0
      %681 = vmatpush1.xpose.msra.mxu0 0.0
      %682 = vmatprep.subr.mxu0 0.0
      %683 = vmatpush1.xpose.msra.mxu0 0.0
      %684 = vmatprep.subr.mxu0 0.0
      %685 = vmatpush1.xpose.msra.mxu0 0.0
      %686 = vmatprep.subr.mxu0 0.0
      %687 = vmatpush1.xpose.msra.mxu0 0.0
      %688 = vmatprep.subr.mxu0 0.0
      %689 = vmatpush1.xpose.msra.mxu0 0.0
      %690 = vmatprep.subr.mxu0 0.0
      %691 = vmatpush1.xpose.msra.mxu0 0.0
      %692 = vmatprep.subr.mxu0 0.0
      %693 = vmatpush1.xpose.msra.mxu0 0.0
      %694 = vmatprep.subr.mxu0 0.0
      %695 = vmatpush1.xpose.msra.mxu0 0.0
      %696 = vmatprep.subr.mxu0 0.0
      %697 = vmatpush1.xpose.msra.mxu0 0.0
      %698 = vmatprep.subr.mxu0 0.0
      %699 = vmatpush1.xpose.msra.mxu0 0.0
      %700 = vmatprep.subr.mxu0 0.0
      %701 = vmatpush1.xpose.msra.mxu0 0.0
      %702 = vmatprep.subr.mxu0 0.0
      %703 = vmatpush1.xpose.msra.mxu0 0.0
      %704 = vmatprep.subr.mxu0 0.0
      %705 = vmatpush1.xpose.msra.mxu0 0.0
      %706 = vmatprep.subr.mxu0 0.0
      %707 = vmatpush1.xpose.msra.mxu0 0.0
      %708 = vmatprep.subr.mxu0 0.0
      %709 = vmatpush1.xpose.msra.mxu0 %v676
      %710 = vmatprep.subr.mxu0 0.0
      %711 = vmatpush2.xpose.msra.mxu0 0.0
      %712 = vmatprep.subr.mxu0 0.0
      %713 = vmatpush2.xpose.msra.mxu0 0.0
      %714 = vmatprep.subr.mxu0 0.0
      %715 = vmatpush2.xpose.msra.mxu0 0.0
      %716 = vmatprep.subr.mxu0 0.0
      %717 = vmatpush2.xpose.msra.mxu0 0.0
      %718 = vmatprep.subr.mxu0 0.0
      %719 = vmatpush2.xpose.msra.mxu0 0.0
      %720 = vmatprep.subr.mxu0 0.0
      %721 = vmatpush2.xpose.msra.mxu0 0.0
      %722 = vmatprep.subr.mxu0 0.0
      %723 = vmatpush2.xpose.msra.mxu0 0.0
      %724 = vmatprep.subr.mxu0 0.0
      %725 = vmatpush2.xpose.msra.mxu0 0.0
      %726 = vmatprep.subr.mxu0 0.0
      %727 = vmatpush2.xpose.msra.mxu0 0.0
      %728 = vmatprep.subr.mxu0 0.0
      %729 = vmatpush2.xpose.msra.mxu0 0.0
      %730 = vmatprep.subr.mxu0 0.0
      %731 = vmatpush2.xpose.msra.mxu0 0.0
      %732 = vmatprep.subr.mxu0 0.0
      %733 = vmatpush2.xpose.msra.mxu0 0.0
      %734 = vmatprep.subr.mxu0 0.0
      %735 = vmatpush2.xpose.msra.mxu0 0.0
      %736 = vmatprep.subr.mxu0 0.0
      %737 = vmatpush2.xpose.msra.mxu0 0.0
      %738 = vmatprep.subr.mxu0 0.0
      %739 = vmatpush2.xpose.msra.mxu0 0.0
      %740 = vmatprep.subr.mxu0 0.0
      %741 = vmatpush2.xpose.msra.mxu0 0.0
      %742 = vmatprep.mubr.f32.mxu0 0.0
      %743 = vmatmul.mubr.f32.gmra.mxu0 %v674
      %v744 = vpop.f32.mrf.mxu0
      %v745 = vadd.f32 0.0, %v744
      %v746 = vpop.f32.mrf.mxu0
      %747 = vdwg.mxu0
      %v748 = vmul.f32 %v745, 0.17677669
      %v749 = vsel %vm237, %v748, -1e+30
      %v750 = vsel %vm366, %v749, -inf
      %751 = vmax.xlane.f32.xlu0 %v750
      %v752 = vpop.xlane.xlu0 %751
      %v753 = vsub.f32 %v749, %v752
      %v754 = vmul.f32 %v753, 1.442695
      %v755 = vpow.pop %v754
      %v756 = vsel %vm366, %v755, 0.0
      %757 = vadd.xlane.f32.xlu0 %v756
      %v758 = vpop.xlane.xlu0 %757
      %v759 = vrcp.pop %v758
      %v760 = vmul.f32 %v755, %v759
      %v761 = vrot.slane %v225, 1
      %v762 = vsel %vm247, %v226, %v761
      %v763 = vrot.slane %v227, 7
      %v764 = vsel %vm250, %v763, %v762
      %v765 = vrot.slane %v228, 6
      %v766 = vsel %vm253, %v765, %v764
      %v767 = vrot.slane %v229, 5
      %v768 = vsel %vm256, %v767, %v766
      %v769 = vrot.slane %v230, 4
      %v770 = vsel %vm259, %v769, %v768
      %v771 = vrot.slane %v231, 3
      %v772 = vsel %vm262, %v771, %v770
      %v773 = vrot.slane %v232, 2
      %v774 = vsel %vm265, %v773, %v772
      %v777 = vsel %vm366, %v760, 0
      %779 = vmatprep.subr.mxu0 0.0
      %780 = vmatpush1.msra.mxu0 0.0
      %781 = vmatprep.subr.mxu0 0.0
      %782 = vmatpush1.msra.mxu0 0.0
      %783 = vmatprep.subr.mxu0 0.0
      %784 = vmatpush1.msra.mxu0 0.0
      %785 = vmatprep.subr.mxu0 0.0
      %786 = vmatpush1.msra.mxu0 0.0
      %787 = vmatprep.subr.mxu0 0.0
      %788 = vmatpush1.msra.mxu0 0.0
      %789 = vmatprep.subr.mxu0 0.0
      %790 = vmatpush1.msra.mxu0 0.0
      %791 = vmatprep.subr.mxu0 0.0
      %792 = vmatpush1.msra.mxu0 0.0
      %793 = vmatprep.subr.mxu0 0.0
      %794 = vmatpush1.msra.mxu0 0.0
      %795 = vmatprep.subr.mxu0 0.0
      %796 = vmatpush1.msra.mxu0 0.0
      %797 = vmatprep.subr.mxu0 0.0
      %798 = vmatpush1.msra.mxu0 0.0
      %799 = vmatprep.subr.mxu0 0.0
      %800 = vmatpush1.msra.mxu0 0.0
      %801 = vmatprep.subr.mxu0 0.0
      %802 = vmatpush1.msra.mxu0 0.0
      %803 = vmatprep.subr.mxu0 0.0
      %804 = vmatpush1.msra.mxu0 0.0
      %805 = vmatprep.subr.mxu0 0.0
      %806 = vmatpush1.msra.mxu0 0.0
      %807 = vmatprep.subr.mxu0 0.0
      %808 = vmatpush1.msra.mxu0 0.0
      %809 = vmatprep.subr.mxu0 0.0
      %810 = vmatpush1.msra.mxu0 %v774
      %811 = vmatprep.subr.mxu0 0.0
      %812 = vmatpush2.msra.mxu0 0.0
      %813 = vmatprep.subr.mxu0 0.0
      %814 = vmatpush2.msra.mxu0 0.0
      %815 = vmatprep.subr.mxu0 0.0
      %816 = vmatpush2.msra.mxu0 0.0
      %817 = vmatprep.subr.mxu0 0.0
      %818 = vmatpush2.msra.mxu0 0.0
      %819 = vmatprep.subr.mxu0 0.0
      %820 = vmatpush2.msra.mxu0 0.0
      %821 = vmatprep.subr.mxu0 0.0
      %822 = vmatpush2.msra.mxu0 0.0
      %823 = vmatprep.subr.mxu0 0.0
      %824 = vmatpush2.msra.mxu0 0.0
      %825 = vmatprep.subr.mxu0 0.0
      %826 = vmatpush2.msra.mxu0 0.0
      %827 = vmatprep.subr.mxu0 0.0
      %828 = vmatpush2.msra.mxu0 0.0
      %829 = vmatprep.subr.mxu0 0.0
      %830 = vmatpush2.msra.mxu0 0.0
      %831 = vmatprep.subr.mxu0 0.0
      %832 = vmatpush2.msra.mxu0 0.0
      %833 = vmatprep.subr.mxu0 0.0
      %834 = vmatpush2.msra.mxu0 0.0
      %835 = vmatprep.subr.mxu0 0.0
      %836 = vmatpush2.msra.mxu0 0.0
      %837 = vmatprep.subr.mxu0 0.0
      %838 = vmatpush2.msra.mxu0 0.0
      %839 = vmatprep.subr.mxu0 0.0
      %840 = vmatpush2.msra.mxu0 0.0
      %841 = vmatprep.subr.mxu0 0.0
      %842 = vmatpush2.msra.mxu0 0.0
      %843 = vmatprep.mubr.f32.mxu0 0.0
      %844 = vmatmul.mubr.f32.gmra.mxu0 %v777
      %v845 = vpop.f32.mrf.mxu0
      %v846 = vadd.f32 0.0, %v845
      %v847 = vpop.f32.mrf.mxu0
      %848 = vdwg.mxu0
      %v849 = vrot.slane %v209, 3
      %v850 = vrot.slane %v210, 2
      %v851 = vsel %vm247, %v850, %v849
      %v852 = vrot.slane %v211, 1
      %v853 = vsel %vm250, %v852, %v851
      %v854 = vsel %vm253, %v212, %v853
      %v855 = vrot.slane %v213, 7
      %v856 = vsel %vm256, %v855, %v854
      %v857 = vrot.slane %v214, 6
      %v858 = vsel %vm259, %v857, %v856
      %v859 = vrot.slane %v215, 5
      %v860 = vsel %vm262, %v859, %v858
      %v861 = vrot.slane %v216, 4
      %v862 = vsel %vm265, %v861, %v860
      %v863 = vsel %vm289, %v862, 0
      %865 = vmatprep.subr.mxu0 0.0
      %866 = vmatpush1.xpose.msra.mxu0 0.0
      %867 = vmatprep.subr.mxu0 0.0
      %868 = vmatpush1.xpose.msra.mxu0 0.0
      %869 = vmatprep.subr.mxu0 0.0
      %870 = vmatpush1.xpose.msra.mxu0 0.0
      %871 = vmatprep.subr.mxu0 0.0
      %872 = vmatpush1.xpose.msra.mxu0 0.0
      %873 = vmatprep.subr.mxu0 0.0
      %874 = vmatpush1.xpose.msra.mxu0 0.0
      %875 = vmatprep.subr.mxu0 0.0
      %876 = vmatpush1.xpose.msra.mxu0 0.0
      %877 = vmatprep.subr.mxu0 0.0
      %878 = vmatpush1.xpose.msra.mxu0 0.0
      %879 = vmatprep.subr.mxu0 0.0
      %880 = vmatpush1.xpose.msra.mxu0 0.0
      %881 = vmatprep.subr.mxu0 0.0
      %882 = vmatpush1.xpose.msra.mxu0 0.0
      %883 = vmatprep.subr.mxu0 0.0
      %884 = vmatpush1.xpose.msra.mxu0 0.0
      %885 = vmatprep.subr.mxu0 0.0
      %886 = vmatpush1.xpose.msra.mxu0 0.0
      %887 = vmatprep.subr.mxu0 0.0
      %888 = vmatpush1.xpose.msra.mxu0 0.0
      %889 = vmatprep.subr.mxu0 0.0
      %890 = vmatpush1.xpose.msra.mxu0 0.0
      %891 = vmatprep.subr.mxu0 0.0
      %892 = vmatpush1.xpose.msra.mxu0 0.0
      %893 = vmatprep.subr.mxu0 0.0
      %894 = vmatpush1.xpose.msra.mxu0 0.0
      %895 = vmatprep.subr.mxu0 0.0
      %896 = vmatpush1.xpose.msra.mxu0 %v676
      %897 = vmatprep.subr.mxu0 0.0
      %898 = vmatpush2.xpose.msra.mxu0 0.0
      %899 = vmatprep.subr.mxu0 0.0
      %900 = vmatpush2.xpose.msra.mxu0 0.0
      %901 = vmatprep.subr.mxu0 0.0
      %902 = vmatpush2.xpose.msra.mxu0 0.0
      %903 = vmatprep.subr.mxu0 0.0
      %904 = vmatpush2.xpose.msra.mxu0 0.0
      %905 = vmatprep.subr.mxu0 0.0
      %906 = vmatpush2.xpose.msra.mxu0 0.0
      %907 = vmatprep.subr.mxu0 0.0
      %908 = vmatpush2.xpose.msra.mxu0 0.0
      %909 = vmatprep.subr.mxu0 0.0
      %910 = vmatpush2.xpose.msra.mxu0 0.0
      %911 = vmatprep.subr.mxu0 0.0
      %912 = vmatpush2.xpose.msra.mxu0 0.0
      %913 = vmatprep.subr.mxu0 0.0
      %914 = vmatpush2.xpose.msra.mxu0 0.0
      %915 = vmatprep.subr.mxu0 0.0
      %916 = vmatpush2.xpose.msra.mxu0 0.0
      %917 = vmatprep.subr.mxu0 0.0
      %918 = vmatpush2.xpose.msra.mxu0 0.0
      %919 = vmatprep.subr.mxu0 0.0
      %920 = vmatpush2.xpose.msra.mxu0 0.0
      %921 = vmatprep.subr.mxu0 0.0
      %922 = vmatpush2.xpose.msra.mxu0 0.0
      %923 = vmatprep.subr.mxu0 0.0
      %924 = vmatpush2.xpose.msra.mxu0 0.0
      %925 = vmatprep.subr.mxu0 0.0
      %926 = vmatpush2.xpose.msra.mxu0 0.0
      %927 = vmatprep.subr.mxu0 0.0
      %928 = vmatpush2.xpose.msra.mxu0 0.0
      %929 = vmatprep.mubr.f32.mxu0 0.0
      %930 = vmatmul.mubr.f32.gmra.mxu0 %v863
      %v931 = vpop.f32.mrf.mxu0
      %v932 = vadd.f32 0.0, %v931
      %v933 = vpop.f32.mrf.mxu0
      %934 = vdwg.mxu0
      %v935 = vmul.f32 %v932, 0.17677669
      %v936 = vsel %vm237, %v935, -1e+30
      %v937 = vsel %vm366, %v936, -inf
      %938 = vmax.xlane.f32.xlu0 %v937
      %v939 = vpop.xlane.xlu0 %938
      %v940 = vsub.f32 %v936, %v939
      %v941 = vmul.f32 %v940, 1.442695
      %v942 = vpow.pop %v941
      %v943 = vsel %vm366, %v942, 0.0
      %944 = vadd.xlane.f32.xlu0 %v943
      %v945 = vpop.xlane.xlu0 %944
      %v946 = vrcp.pop %v945
      %v947 = vmul.f32 %v942, %v946
      %v949 = vsel %vm366, %v947, 0
      %951 = vmatprep.subr.mxu0 0.0
      %952 = vmatpush1.msra.mxu0 0.0
      %953 = vmatprep.subr.mxu0 0.0
      %954 = vmatpush1.msra.mxu0 0.0
      %955 = vmatprep.subr.mxu0 0.0
      %956 = vmatpush1.msra.mxu0 0.0
      %957 = vmatprep.subr.mxu0 0.0
      %958 = vmatpush1.msra.mxu0 0.0
      %959 = vmatprep.subr.mxu0 0.0
      %960 = vmatpush1.msra.mxu0 0.0
      %961 = vmatprep.subr.mxu0 0.0
      %962 = vmatpush1.msra.mxu0 0.0
      %963 = vmatprep.subr.mxu0 0.0
      %964 = vmatpush1.msra.mxu0 0.0
      %965 = vmatprep.subr.mxu0 0.0
      %966 = vmatpush1.msra.mxu0 0.0
      %967 = vmatprep.subr.mxu0 0.0
      %968 = vmatpush1.msra.mxu0 0.0
      %969 = vmatprep.subr.mxu0 0.0
      %970 = vmatpush1.msra.mxu0 0.0
      %971 = vmatprep.subr.mxu0 0.0
      %972 = vmatpush1.msra.mxu0 0.0
      %973 = vmatprep.subr.mxu0 0.0
      %974 = vmatpush1.msra.mxu0 0.0
      %975 = vmatprep.subr.mxu0 0.0
      %976 = vmatpush1.msra.mxu0 0.0
      %977 = vmatprep.subr.mxu0 0.0
      %978 = vmatpush1.msra.mxu0 0.0
      %979 = vmatprep.subr.mxu0 0.0
      %980 = vmatpush1.msra.mxu0 0.0
      %981 = vmatprep.subr.mxu0 0.0
      %982 = vmatpush1.msra.mxu0 %v774
      %983 = vmatprep.subr.mxu0 0.0
      %984 = vmatpush2.msra.mxu0 0.0
      %985 = vmatprep.subr.mxu0 0.0
      %986 = vmatpush2.msra.mxu0 0.0
      %987 = vmatprep.subr.mxu0 0.0
      %988 = vmatpush2.msra.mxu0 0.0
      %989 = vmatprep.subr.mxu0 0.0
      %990 = vmatpush2.msra.mxu0 0.0
      %991 = vmatprep.subr.mxu0 0.0
      %992 = vmatpush2.msra.mxu0 0.0
      %993 = vmatprep.subr.mxu0 0.0
      %994 = vmatpush2.msra.mxu0 0.0
      %995 = vmatprep.subr.mxu0 0.0
      %996 = vmatpush2.msra.mxu0 0.0
      %997 = vmatprep.subr.mxu0 0.0
      %998 = vmatpush2.msra.mxu0 0.0
      %999 = vmatprep.subr.mxu0 0.0
      %1000 = vmatpush2.msra.mxu0 0.0
      %1001 = vmatprep.subr.mxu0 0.0
      %1002 = vmatpush2.msra.mxu0 0.0
      %1003 = vmatprep.subr.mxu0 0.0
      %1004 = vmatpush2.msra.mxu0 0.0
      %1005 = vmatprep.subr.mxu0 0.0
      %1006 = vmatpush2.msra.mxu0 0.0
      %1007 = vmatprep.subr.mxu0 0.0
      %1008 = vmatpush2.msra.mxu0 0.0
      %1009 = vmatprep.subr.mxu0 0.0
      %1010 = vmatpush2.msra.mxu0 0.0
      %1011 = vmatprep.subr.mxu0 0.0
      %1012 = vmatpush2.msra.mxu0 0.0
      %1013 = vmatprep.subr.mxu0 0.0
      %1014 = vmatpush2.msra.mxu0 0.0
      %1015 = vmatprep.mubr.f32.mxu0 0.0
      %1016 = vmatmul.mubr.f32.gmra.mxu0 %v949
      %v1017 = vpop.f32.mrf.mxu0
      %v1018 = vadd.f32 0.0, %v1017
      %v1019 = vpop.f32.mrf.mxu0
      %1020 = vdwg.mxu0
      %1022 = vrot.lane.b32.xlu0 %v643, 32
      %v1023 = vpop.permute.xlu0 %1022
      %1026 = vrot.lane.b32.xlu0 %v846, 64
      %v1027 = vpop.permute.xlu0 %1026
      %1030 = vrot.lane.b32.xlu0 %v1018, 96
      %v1031 = vpop.permute.xlu0 %1030
      %v1033 = vsel %vm289, %v471, %v1023
      %vm1034 = vcmask 523264
      %v1035 = vsel %vm1034, %v1033, %v1027
      %vm1036 = vcmask 785408
      %v1037 = vsel %vm1036, %v1035, %v1031
      %1038 = vst [vmem:[%s208] sm:$0xff] %v1037
      %p1039 = scmp.lt.s32.totalorder %s14, 1
      %s1040 = scalar_select %p1039, %s14, 1
      %s1041 = smul.addr %s1040, 8
      %s1042 = scalar_lea.vmem %s3, %s1041
      // Predicated region
      $region33: #{transformer_block_forward.5} parent=31 // pred_check
        %p1043 = pneg %p110
      $region34: #{transformer_block_forward.5} parent=31 // pred_check_branch
        %1045 = sbr.rel (%p1043) target = $region36
      $region35: #{transformer_block_forward.5} parent=31 // pred_region
        _
      $region36: #{transformer_block_forward.5} parent=31 // pred_fallthru
        _
    $region32: #{transformer_block_forward.5} parent=5 // pred_fallthru
      _
    %p1046 = scmp.le.s32.totalorder 2, %s9
    // Predicated region
    $region37: #{transformer_block_forward.5} parent=5 // pred_check
      %p1047 = pneg %p1046
    $region38: #{transformer_block_forward.5} parent=5 // pred_check_branch
      %1049 = sbr.rel (%p1047) target = $region40
    $region39: #{transformer_block_forward.5} parent=5 // pred_region
      %s1050 = ssub.s32 %s9, 2
      // Predicated region
      $region41: #{transformer_block_forward.5} parent=39 // pred_check
        %p1051 = pneg %p116
      $region42: #{transformer_block_forward.5} parent=39 // pred_check_branch
        %1053 = sbr.rel (%p1051) target = $region44
      $region43: #{transformer_block_forward.5} parent=39 // pred_region
        %p1054 = scmp.lt.s32.totalorder %s15, 1
        %s1055 = scalar_select %p1054, %s15, 1
        %s1056 = smul.addr %s1055, 8
        %s1057 = scalar_lea.vmem %s3, %s1056
      $region44: #{transformer_block_forward.5} parent=39 // pred_fallthru
        _
    $region40: #{transformer_block_forward.5} parent=5 // pred_fallthru
      _
  $region6: #{transformer_block_forward.5} parent=0 // loop_footer
    %s13 = sadd.s32 1, %s9
  $region7: #{transformer_block_forward.5} parent=0 // loop_footer_branch
    %8 = sbr.rel target = $region3
  $region8: #{transformer_block_forward.5} parent=0 // loop_exit
    _

</llo_original>
